<compile_context>
chip_gen: v5e
topology: v5e:2x2
jax: 0.10.0
libtpu: 0.0.40
codegen_flags: <defaults>
</compile_context>

<pallas_src>
import numpy as np
import jax
import jax.numpy as jnp
from jax.experimental import pallas as pl
from jax.experimental.pallas import tpu as pltpu


def _softplus(x):
    # Matches torch.nn.Softplus(beta=1, threshold=20): linear above threshold.
    return jnp.where(x > 20.0, x, jnp.log1p(jnp.exp(jnp.minimum(x, 20.0))))


def _round_up(x, m):
    return ((x + m - 1) // m) * m


def neural_ode_rk4_kernel(nsteps_ref, h_ref, z0_ref, w1_ref, b1_ref,
                          w2_ref, b2_ref, w3_ref, b3_ref,
                          traj_ref, z_ref):
    i = pl.program_id(0)          # interval index (t[i] -> t[i+1])
    s = pl.program_id(1)          # RK4 sub-step index within the interval

    # Initialise the carried ODE state from z0 at the very first grid point.
    @pl.when(jnp.logical_and(i == 0, s == 0))
    def _():
        z_ref[...] = z0_ref[...]

    def mlp(z):
        # First layer: contraction dim == ninp (tiny) -> VPU broadcast FMAs
        # instead of a degenerate MXU matmul.
        n_in = w1_ref.shape[0]
        h1 = b1_ref[...]                                      # [1, H]
        for c in range(n_in):                                 # static unroll
            h1 = h1 + z[:, c:c + 1] * w1_ref[c:c + 1, :]      # [B,1]*[1,H]
        h1 = _softplus(h1)
        h2 = _softplus(
            jnp.dot(h1, w2_ref[...], preferred_element_type=jnp.float32)
            + b2_ref[...])
        # Output lane dim is padded to 128; padded rows/cols of w3/b3 are zero
        # so dx beyond ninp is exactly 0 (this also realises the module's
        # `pad()` for extra_in_dim > 0).
        return (jnp.dot(h2, w3_ref[...], preferred_element_type=jnp.float32)
                + b3_ref[...])

    # Intervals may need fewer sub-steps than the grid extent -> mask.
    @pl.when(s < nsteps_ref[i])
    def _():
        h = h_ref[i]                                          # scalar from SMEM
        z = z_ref[...]
        k1 = mlp(z)
        k2 = mlp(z + (0.5 * h) * k1)
        k3 = mlp(z + (0.5 * h) * k2)
        k4 = mlp(z + h * k3)
        z_new = z + (h / 6.0) * (k1 + 2.0 * (k2 + k3) + k4)
        z_ref[...] = z_new
        # Lane-dense [B, 128] store; the last active sub-step of interval i
        # leaves z(t[i+1]) in the output block (flushed when i advances).
        traj_ref[0, :, :] = z_new


def _pad_params(params, nhid_pad, dpad):
    w1, b1 = params["w1"], params["b1"]
    w2, b2 = params["w2"], params["b2"]
    w3, b3 = params["w3"], params["b3"]
    n_in, nhid = w1.shape
    nout = w3.shape[1]
    w1p = jnp.zeros((n_in, nhid_pad), jnp.float32).at[:, :nhid].set(w1)
    b1p = jnp.zeros((1, nhid_pad), jnp.float32).at[:, :nhid].set(b1)
    w2p = jnp.zeros((nhid_pad, nhid_pad), jnp.float32).at[:nhid, :nhid].set(w2)
    b2p = jnp.zeros((1, nhid_pad), jnp.float32).at[:, :nhid].set(b2)
    w3p = jnp.zeros((nhid_pad, dpad), jnp.float32).at[:nhid, :nout].set(w3)
    b3p = jnp.zeros((1, dpad), jnp.float32).at[:, :nout].set(b3)
    return w1p, b1p, w2p, b2p, w3p, b3p


def neural_ode_forward(z0, t, params, hmax=0.001):
    """Fused RK4 NeuralODE forward.  z0: [B, ninp] f32, t: concrete 1-D times.
    Returns the trajectory [time_len, B, ninp] (z[0] = z0)."""
    t = np.asarray(t, dtype=np.float32)
    time_len = int(t.shape[0])
    assert time_len >= 2, "need at least two time points"
    B, ninp = z0.shape

    # Per-interval sub-step count / size, as the torch solver computes them
    # (it calls .item(), i.e. t is concrete there too).
    dt = np.diff(t)
    n_steps = np.maximum(np.ceil(np.abs(dt) / hmax), 1.0).astype(np.int32)
    h_all = (dt / n_steps).astype(np.float32)
    max_sub = int(n_steps.max())

    nhid = params["w2"].shape[0]
    nout = params["w3"].shape[1]
    nhid_pad = _round_up(nhid, 128)            # 200 -> 256 (clean MXU tiles)
    dpad = _round_up(max(ninp, nout, 1), 128)  # lane-dense state / output

    w1p, b1p, w2p, b2p, w3p, b3p = _pad_params(params, nhid_pad, dpad)
    z0p = jnp.zeros((B, dpad), jnp.float32).at[:, :ninp].set(z0)

    num_sub_total = int(n_steps.sum())
    flops_per_eval = 2 * B * nhid_pad * (nhid_pad + dpad) + 4 * B * nhid_pad
    cost = pl.CostEstimate(
        flops=4 * num_sub_total * flops_per_eval,
        transcendentals=4 * num_sub_total * 2 * B * nhid_pad,
        bytes_accessed=4 * (w1p.size + w2p.size + w3p.size + z0p.size
                            + (time_len - 1) * B * dpad),
    )

    const = lambda i, s: (0, 0)               # weights stay VMEM-resident
    traj_pad = pl.pallas_call(
        neural_ode_rk4_kernel,
        out_shape=jax.ShapeDtypeStruct((time_len - 1, B, dpad), jnp.float32),
        grid=(time_len - 1, max_sub),
        in_specs=[
            pl.BlockSpec(memory_space=pltpu.MemorySpace.SMEM),   # n_steps[i]
            pl.BlockSpec(memory_space=pltpu.MemorySpace.SMEM),   # h[i]
            pl.BlockSpec((B, dpad), const),                      # z0 (padded)
            pl.BlockSpec((w1p.shape[0], nhid_pad), const),       # w1
            pl.BlockSpec((1, nhid_pad), const),                  # b1
            pl.BlockSpec((nhid_pad, nhid_pad), const),           # w2
            pl.BlockSpec((1, nhid_pad), const),                  # b2
            pl.BlockSpec((nhid_pad, dpad), const),               # w3
            pl.BlockSpec((1, dpad), const),                      # b3
        ],
        out_specs=pl.BlockSpec((1, B, dpad), lambda i, s: (i, 0, 0)),
        scratch_shapes=[pltpu.VMEM((B, dpad), jnp.float32)],     # carried z
        compiler_params=pltpu.CompilerParams(
            # The state carries across both grid axes -> sequential.
            dimension_semantics=("arbitrary", "arbitrary"),
            # Working set (padded weights + a few [B,128] tiles) is ~1 MiB.
            vmem_limit_bytes=8 * 1024 * 1024,
        ),
        cost_estimate=cost,
    )(jnp.asarray(n_steps), jnp.asarray(h_all), z0p,
      w1p, b1p, w2p, b2p, w3p, b3p)

    traj = traj_pad[:, :, :ninp]
    return jnp.concatenate([z0[None, :, :], traj], axis=0)


# ----------------------------------------------------------------------------
# Deterministic init + pure-JAX reference (mirrors the torch solver exactly).
# ----------------------------------------------------------------------------
def init_params(key, ninp, nhid, nout):
    ks = jax.random.split(key, 6)

    def linear(kw, kb, fan_in, fan_out):
        bound = 1.0 / np.sqrt(fan_in)
        w = jax.random.uniform(kw, (fan_in, fan_out), jnp.float32, -bound, bound)
        b = jax.random.uniform(kb, (1, fan_out), jnp.float32, -bound, bound)
        return w, b

    w1, b1 = linear(ks[0], ks[1], ninp, nhid)
    w2, b2 = linear(ks[2], ks[3], nhid, nhid)
    w3, b3 = linear(ks[4], ks[5], nhid, nout)
    return dict(w1=w1, b1=b1, w2=w2, b2=b2, w3=w3, b3=b3)


def _ref_mlp(z, p):
    h1 = _softplus(z @ p["w1"] + p["b1"])
    h2 = _softplus(h1 @ p["w2"] + p["b2"])
    return h2 @ p["w3"] + p["b3"]


def reference_forward(z0, t, params, hmax):
    t = np.asarray(t, dtype=np.float32)
    dt = np.diff(t)
    n_steps = np.maximum(np.ceil(np.abs(dt) / hmax), 1.0).astype(np.int32)
    h_all = (dt / n_steps).astype(np.float32)
    zs = [z0]
    z = z0
    for i in range(len(dt)):
        h = float(h_all[i])
        for _ in range(int(n_steps[i])):
            k1 = _ref_mlp(z, params)
            k2 = _ref_mlp(z + 0.5 * h * k1, params)
            k3 = _ref_mlp(z + 0.5 * h * k2, params)
            k4 = _ref_mlp(z + h * k3, params)
            z = z + h * (k1 + 2.0 * (k2 + k3) + k4) / 6.0
        zs.append(z)
    return jnp.stack(zs, axis=0)


if __name__ == "__main__":
    # Module defaults: ninp=2, nhid=200 (3 linear layers, 2 softplus).
    ninp, nhid, batch = 2, 200, 8
    hmax = 0.01   # coarser than the module default 0.001 to keep the demo small

    key = jax.random.PRNGKey(0)
    k_z, k_p = jax.random.split(key)
    z0 = jax.random.normal(k_z, (batch, ninp), jnp.float32)
    params = init_params(k_p, ninp, nhid, ninp)

    # Non-uniform time grid -> intervals need different RK4 sub-step counts
    # (exercises the in-kernel masking path).  60 MLP evals, one pallas_call.
    t = np.array([0.0, 0.03, 0.08, 0.15], dtype=np.float32)

    out = neural_ode_forward(z0, t, params, hmax=hmax)
    out = jax.block_until_ready(out)

    ref = reference_forward(z0, t, params, hmax)
    assert out.shape == (t.shape[0], batch, ninp), out.shape
    err = float(jnp.max(jnp.abs(out - ref)))
    assert jnp.allclose(out, ref, atol=1e-4, rtol=1e-4), f"max abs err {err}"

    print("KERNEL_OK")
</pallas_src>

<mosaic_0001>
module attributes {stable_mosaic.version = 11 : i64} {
  func.func @neural_ode_rk4_kernel(%arg0: i32, %arg1: i32, %arg2: memref<3xi32, #tpu.memory_space<smem>>, %arg3: memref<3xf32, #tpu.memory_space<smem>>, %arg4: memref<8x128xf32, #tpu.memory_space<vmem>>, %arg5: memref<2x256xf32, #tpu.memory_space<vmem>>, %arg6: memref<1x256xf32, #tpu.memory_space<vmem>>, %arg7: memref<256x256xf32, #tpu.memory_space<vmem>>, %arg8: memref<1x256xf32, #tpu.memory_space<vmem>>, %arg9: memref<256x128xf32, #tpu.memory_space<vmem>>, %arg10: memref<1x128xf32, #tpu.memory_space<vmem>>, %arg11: memref<1x8x128xf32, #tpu.memory_space<vmem>>, %arg12: memref<8x128xf32, #tpu.memory_space<vmem>>) attributes {dimension_semantics = [#tpu.dimension_semantics<arbitrary>, #tpu.dimension_semantics<arbitrary>], iteration_bounds = array<i64: 3, 8>, scalar_prefetch = 0 : i64, scratch_operands = 1 : i64, tpu.core_type = #tpu.core_type<tc>, window_params = [{transform_indices = @transform_0, window_bounds = array<i64: 3>}, {transform_indices = @transform_1, window_bounds = array<i64: 3>}, {pipeline_mode = #tpu.pipeline_mode<synchronous>, transform_indices = @transform_2, window_bounds = array<i64: 8, 128>}, {pipeline_mode = #tpu.pipeline_mode<synchronous>, transform_indices = @transform_3, window_bounds = array<i64: 2, 256>}, {pipeline_mode = #tpu.pipeline_mode<synchronous>, transform_indices = @transform_4, window_bounds = array<i64: 1, 256>}, {pipeline_mode = #tpu.pipeline_mode<synchronous>, transform_indices = @transform_5, window_bounds = array<i64: 256, 256>}, {pipeline_mode = #tpu.pipeline_mode<synchronous>, transform_indices = @transform_6, window_bounds = array<i64: 1, 256>}, {pipeline_mode = #tpu.pipeline_mode<synchronous>, transform_indices = @transform_7, window_bounds = array<i64: 256, 128>}, {pipeline_mode = #tpu.pipeline_mode<synchronous>, transform_indices = @transform_8, window_bounds = array<i64: 1, 128>}, {transform_indices = @transform_9, window_bounds = array<i64: 1, 8, 128>}]} {
    %c0_i32 = arith.constant 0 : i32
    %0 = arith.cmpi eq, %arg0, %c0_i32 : i32
    %c0_i32_0 = arith.constant 0 : i32
    %1 = arith.cmpi eq, %arg1, %c0_i32_0 : i32
    %2 = arith.andi %0, %1 : i1
    %3 = arith.extui %2 : i1 to i32
    %c0_i32_1 = arith.constant 0 : i32
    %4 = arith.cmpi ne, %3, %c0_i32_1 : i32
    scf.if %4 {
      %c0 = arith.constant 0 : index
      %c0_3 = arith.constant 0 : index
      %10 = vector.load %arg4[%c0, %c0_3] : memref<8x128xf32, #tpu.memory_space<vmem>>, vector<8x128xf32>
      %c0_4 = arith.constant 0 : index
      %c0_5 = arith.constant 0 : index
      %11 = vector.load %arg12[%c0_4, %c0_5] : memref<8x128xf32, #tpu.memory_space<vmem>>, vector<8x128xf32>
      tpu.vector_store %arg12[%c0_4, %c0_5], %10 {strides = array<i32>} : memref<8x128xf32, #tpu.memory_space<vmem>>, vector<8x128xf32>,
    } else {
    }
    %5 = arith.index_cast %arg0 : i32 to index
    %6 = memref.load %arg2[%5] : memref<3xi32, #tpu.memory_space<smem>>
    %7 = arith.cmpi slt, %arg1, %6 : i32
    %8 = arith.extui %7 : i1 to i32
    %c0_i32_2 = arith.constant 0 : i32
    %9 = arith.cmpi ne, %8, %c0_i32_2 : i32
    scf.if %9 {
      %10 = arith.index_cast %arg0 : i32 to index
      %11 = memref.load %arg3[%10] : memref<3xf32, #tpu.memory_space<smem>>
      %c0 = arith.constant 0 : index
      %c0_3 = arith.constant 0 : index
      %12 = vector.load %arg12[%c0, %c0_3] : memref<8x128xf32, #tpu.memory_space<vmem>>, vector<8x128xf32>
      %c0_4 = arith.constant 0 : index
      %c0_5 = arith.constant 0 : index
      %13 = vector.load %arg6[%c0_4, %c0_5] : memref<1x256xf32, #tpu.memory_space<vmem>>, vector<1x256xf32>
      %14 = vector.extract_strided_slice %12 {offsets = [0, 0], sizes = [8, 1], strides = [1, 1]} : vector<8x128xf32> to vector<8x1xf32>
      %c0_6 = arith.constant 0 : index
      %c0_7 = arith.constant 0 : index
      %15 = vector.load %arg5[%c0_6, %c0_7] : memref<2x256xf32, #tpu.memory_space<vmem>>, vector<1x256xf32>
      %16 = vector.broadcast %14 : vector<8x1xf32> to vector<8x256xf32>
      %17 = vector.broadcast %15 : vector<1x256xf32> to vector<8x256xf32>
      %18 = arith.mulf %16, %17 : vector<8x256xf32>
      %19 = vector.broadcast %13 : vector<1x256xf32> to vector<8x256xf32>
      %20 = arith.addf %19, %18 : vector<8x256xf32>
      %21 = vector.extract_strided_slice %12 {offsets = [0, 1], sizes = [8, 1], strides = [1, 1]} : vector<8x128xf32> to vector<8x1xf32>
      %c1 = arith.constant 1 : index
      %c0_8 = arith.constant 0 : index
      %22 = vector.load %arg5[%c1, %c0_8] : memref<2x256xf32, #tpu.memory_space<vmem>>, vector<1x256xf32>
      %23 = vector.broadcast %21 : vector<8x1xf32> to vector<8x256xf32>
      %24 = vector.broadcast %22 : vector<1x256xf32> to vector<8x256xf32>
      %25 = arith.mulf %23, %24 : vector<8x256xf32>
      %26 = arith.addf %20, %25 : vector<8x256xf32>
      %cst = arith.constant 2.000000e+01 : f32
      %27 = vector.broadcast %cst : f32 to vector<8x256xf32>
      %28 = arith.cmpf ogt, %26, %27 : vector<8x256xf32>
      %cst_9 = arith.constant 2.000000e+01 : f32
      %29 = vector.broadcast %cst_9 : f32 to vector<8x256xf32>
      %30 = arith.minimumf %26, %29 : vector<8x256xf32>
      %31 = math.exp %30 : vector<8x256xf32>
      %32 = math.log1p %31 : vector<8x256xf32>
      %33 = arith.select %28, %26, %32 : vector<8x256xi1>, vector<8x256xf32>
      %c0_10 = arith.constant 0 : index
      %c0_11 = arith.constant 0 : index
      %34 = vector.load %arg7[%c0_10, %c0_11] : memref<256x256xf32, #tpu.memory_space<vmem>>, vector<256x256xf32>
      %cst_12 = arith.constant dense<0.000000e+00> : vector<8x256xf32>
      %35 = tpu.matmul %33, %34, %cst_12 {dimension_numbers = #tpu.dot_dimension_numbers<[1], [0], [0], [1], [0, 0, 1, 1], [], []>} : vector<8x256xf32>, vector<256x256xf32>, vector<8x256xf32> -> vector<8x256xf32>
      %c0_13 = arith.constant 0 : index
      %c0_14 = arith.constant 0 : index
      %36 = vector.load %arg8[%c0_13, %c0_14] : memref<1x256xf32, #tpu.memory_space<vmem>>, vector<1x256xf32>
      %37 = vector.broadcast %36 : vector<1x256xf32> to vector<8x256xf32>
      %38 = arith.addf %35, %37 : vector<8x256xf32>
      %cst_15 = arith.constant 2.000000e+01 : f32
      %39 = vector.broadcast %cst_15 : f32 to vector<8x256xf32>
      %40 = arith.cmpf ogt, %38, %39 : vector<8x256xf32>
      %cst_16 = arith.constant 2.000000e+01 : f32
      %41 = vector.broadcast %cst_16 : f32 to vector<8x256xf32>
      %42 = arith.minimumf %38, %41 : vector<8x256xf32>
      %43 = math.exp %42 : vector<8x256xf32>
      %44 = math.log1p %43 : vector<8x256xf32>
      %45 = arith.select %40, %38, %44 : vector<8x256xi1>, vector<8x256xf32>
      %c0_17 = arith.constant 0 : index
      %c0_18 = arith.constant 0 : index
      %46 = vector.load %arg9[%c0_17, %c0_18] : memref<256x128xf32, #tpu.memory_space<vmem>>, vector<256x128xf32>
      %cst_19 = arith.constant dense<0.000000e+00> : vector<8x128xf32>
      %47 = tpu.matmul %45, %46, %cst_19 {dimension_numbers = #tpu.dot_dimension_numbers<[1], [0], [0], [1], [0, 0, 1, 1], [], []>} : vector<8x256xf32>, vector<256x128xf32>, vector<8x128xf32> -> vector<8x128xf32>
      %c0_20 = arith.constant 0 : index
      %c0_21 = arith.constant 0 : index
      %48 = vector.load %arg10[%c0_20, %c0_21] : memref<1x128xf32, #tpu.memory_space<vmem>>, vector<1x128xf32>
      %49 = vector.broadcast %48 : vector<1x128xf32> to vector<8x128xf32>
      %50 = arith.addf %47, %49 : vector<8x128xf32>
      %cst_22 = arith.constant 5.000000e-01 : f32
      %51 = arith.mulf %cst_22, %11 : f32
      %52 = vector.broadcast %51 : f32 to vector<8x128xf32>
      %53 = arith.mulf %52, %50 : vector<8x128xf32>
      %54 = arith.addf %12, %53 : vector<8x128xf32>
      %c0_23 = arith.constant 0 : index
      %c0_24 = arith.constant 0 : index
      %55 = vector.load %arg6[%c0_23, %c0_24] : memref<1x256xf32, #tpu.memory_space<vmem>>, vector<1x256xf32>
      %56 = vector.extract_strided_slice %54 {offsets = [0, 0], sizes = [8, 1], strides = [1, 1]} : vector<8x128xf32> to vector<8x1xf32>
      %c0_25 = arith.constant 0 : index
      %c0_26 = arith.constant 0 : index
      %57 = vector.load %arg5[%c0_25, %c0_26] : memref<2x256xf32, #tpu.memory_space<vmem>>, vector<1x256xf32>
      %58 = vector.broadcast %56 : vector<8x1xf32> to vector<8x256xf32>
      %59 = vector.broadcast %57 : vector<1x256xf32> to vector<8x256xf32>
      %60 = arith.mulf %58, %59 : vector<8x256xf32>
      %61 = vector.broadcast %55 : vector<1x256xf32> to vector<8x256xf32>
      %62 = arith.addf %61, %60 : vector<8x256xf32>
      %63 = vector.extract_strided_slice %54 {offsets = [0, 1], sizes = [8, 1], strides = [1, 1]} : vector<8x128xf32> to vector<8x1xf32>
      %c1_27 = arith.constant 1 : index
      %c0_28 = arith.constant 0 : index
      %64 = vector.load %arg5[%c1_27, %c0_28] : memref<2x256xf32, #tpu.memory_space<vmem>>, vector<1x256xf32>
      %65 = vector.broadcast %63 : vector<8x1xf32> to vector<8x256xf32>
      %66 = vector.broadcast %64 : vector<1x256xf32> to vector<8x256xf32>
      %67 = arith.mulf %65, %66 : vector<8x256xf32>
      %68 = arith.addf %62, %67 : vector<8x256xf32>
      %cst_29 = arith.constant 2.000000e+01 : f32
      %69 = vector.broadcast %cst_29 : f32 to vector<8x256xf32>
      %70 = arith.cmpf ogt, %68, %69 : vector<8x256xf32>
      %cst_30 = arith.constant 2.000000e+01 : f32
      %71 = vector.broadcast %cst_30 : f32 to vector<8x256xf32>
      %72 = arith.minimumf %68, %71 : vector<8x256xf32>
      %73 = math.exp %72 : vector<8x256xf32>
      %74 = math.log1p %73 : vector<8x256xf32>
      %75 = arith.select %70, %68, %74 : vector<8x256xi1>, vector<8x256xf32>
      %c0_31 = arith.constant 0 : index
      %c0_32 = arith.constant 0 : index
      %76 = vector.load %arg7[%c0_31, %c0_32] : memref<256x256xf32, #tpu.memory_space<vmem>>, vector<256x256xf32>
      %cst_33 = arith.constant dense<0.000000e+00> : vector<8x256xf32>
      %77 = tpu.matmul %75, %76, %cst_33 {dimension_numbers = #tpu.dot_dimension_numbers<[1], [0], [0], [1], [0, 0, 1, 1], [], []>} : vector<8x256xf32>, vector<256x256xf32>, vector<8x256xf32> -> vector<8x256xf32>
      %c0_34 = arith.constant 0 : index
      %c0_35 = arith.constant 0 : index
      %78 = vector.load %arg8[%c0_34, %c0_35] : memref<1x256xf32, #tpu.memory_space<vmem>>, vector<1x256xf32>
      %79 = vector.broadcast %78 : vector<1x256xf32> to vector<8x256xf32>
      %80 = arith.addf %77, %79 : vector<8x256xf32>
      %cst_36 = arith.constant 2.000000e+01 : f32
      %81 = vector.broadcast %cst_36 : f32 to vector<8x256xf32>
      %82 = arith.cmpf ogt, %80, %81 : vector<8x256xf32>
      %cst_37 = arith.constant 2.000000e+01 : f32
      %83 = vector.broadcast %cst_37 : f32 to vector<8x256xf32>
      %84 = arith.minimumf %80, %83 : vector<8x256xf32>
      %85 = math.exp %84 : vector<8x256xf32>
      %86 = math.log1p %85 : vector<8x256xf32>
      %87 = arith.select %82, %80, %86 : vector<8x256xi1>, vector<8x256xf32>
      %c0_38 = arith.constant 0 : index
      %c0_39 = arith.constant 0 : index
      %88 = vector.load %arg9[%c0_38, %c0_39] : memref<256x128xf32, #tpu.memory_space<vmem>>, vector<256x128xf32>
      %cst_40 = arith.constant dense<0.000000e+00> : vector<8x128xf32>
      %89 = tpu.matmul %87, %88, %cst_40 {dimension_numbers = #tpu.dot_dimension_numbers<[1], [0], [0], [1], [0, 0, 1, 1], [], []>} : vector<8x256xf32>, vector<256x128xf32>, vector<8x128xf32> -> vector<8x128xf32>
      %c0_41 = arith.constant 0 : index
      %c0_42 = arith.constant 0 : index
      %90 = vector.load %arg10[%c0_41, %c0_42] : memref<1x128xf32, #tpu.memory_space<vmem>>, vector<1x128xf32>
      %91 = vector.broadcast %90 : vector<1x128xf32> to vector<8x128xf32>
      %92 = arith.addf %89, %91 : vector<8x128xf32>
      %cst_43 = arith.constant 5.000000e-01 : f32
      %93 = arith.mulf %cst_43, %11 : f32
      %94 = vector.broadcast %93 : f32 to vector<8x128xf32>
      %95 = arith.mulf %94, %92 : vector<8x128xf32>
      %96 = arith.addf %12, %95 : vector<8x128xf32>
      %c0_44 = arith.constant 0 : index
      %c0_45 = arith.constant 0 : index
      %97 = vector.load %arg6[%c0_44, %c0_45] : memref<1x256xf32, #tpu.memory_space<vmem>>, vector<1x256xf32>
      %98 = vector.extract_strided_slice %96 {offsets = [0, 0], sizes = [8, 1], strides = [1, 1]} : vector<8x128xf32> to vector<8x1xf32>
      %c0_46 = arith.constant 0 : index
      %c0_47 = arith.constant 0 : index
      %99 = vector.load %arg5[%c0_46, %c0_47] : memref<2x256xf32, #tpu.memory_space<vmem>>, vector<1x256xf32>
      %100 = vector.broadcast %98 : vector<8x1xf32> to vector<8x256xf32>
      %101 = vector.broadcast %99 : vector<1x256xf32> to vector<8x256xf32>
      %102 = arith.mulf %100, %101 : vector<8x256xf32>
      %103 = vector.broadcast %97 : vector<1x256xf32> to vector<8x256xf32>
      %104 = arith.addf %103, %102 : vector<8x256xf32>
      %105 = vector.extract_strided_slice %96 {offsets = [0, 1], sizes = [8, 1], strides = [1, 1]} : vector<8x128xf32> to vector<8x1xf32>
      %c1_48 = arith.constant 1 : index
      %c0_49 = arith.constant 0 : index
      %106 = vector.load %arg5[%c1_48, %c0_49] : memref<2x256xf32, #tpu.memory_space<vmem>>, vector<1x256xf32>
      %107 = vector.broadcast %105 : vector<8x1xf32> to vector<8x256xf32>
      %108 = vector.broadcast %106 : vector<1x256xf32> to vector<8x256xf32>
      %109 = arith.mulf %107, %108 : vector<8x256xf32>
      %110 = arith.addf %104, %109 : vector<8x256xf32>
      %cst_50 = arith.constant 2.000000e+01 : f32
      %111 = vector.broadcast %cst_50 : f32 to vector<8x256xf32>
      %112 = arith.cmpf ogt, %110, %111 : vector<8x256xf32>
      %cst_51 = arith.constant 2.000000e+01 : f32
      %113 = vector.broadcast %cst_51 : f32 to vector<8x256xf32>
      %114 = arith.minimumf %110, %113 : vector<8x256xf32>
      %115 = math.exp %114 : vector<8x256xf32>
      %116 = math.log1p %115 : vector<8x256xf32>
      %117 = arith.select %112, %110, %116 : vector<8x256xi1>, vector<8x256xf32>
      %c0_52 = arith.constant 0 : index
      %c0_53 = arith.constant 0 : index
      %118 = vector.load %arg7[%c0_52, %c0_53] : memref<256x256xf32, #tpu.memory_space<vmem>>, vector<256x256xf32>
      %cst_54 = arith.constant dense<0.000000e+00> : vector<8x256xf32>
      %119 = tpu.matmul %117, %118, %cst_54 {dimension_numbers = #tpu.dot_dimension_numbers<[1], [0], [0], [1], [0, 0, 1, 1], [], []>} : vector<8x256xf32>, vector<256x256xf32>, vector<8x256xf32> -> vector<8x256xf32>
      %c0_55 = arith.constant 0 : index
      %c0_56 = arith.constant 0 : index
      %120 = vector.load %arg8[%c0_55, %c0_56] : memref<1x256xf32, #tpu.memory_space<vmem>>, vector<1x256xf32>
      %121 = vector.broadcast %120 : vector<1x256xf32> to vector<8x256xf32>
      %122 = arith.addf %119, %121 : vector<8x256xf32>
      %cst_57 = arith.constant 2.000000e+01 : f32
      %123 = vector.broadcast %cst_57 : f32 to vector<8x256xf32>
      %124 = arith.cmpf ogt, %122, %123 : vector<8x256xf32>
      %cst_58 = arith.constant 2.000000e+01 : f32
      %125 = vector.broadcast %cst_58 : f32 to vector<8x256xf32>
      %126 = arith.minimumf %122, %125 : vector<8x256xf32>
      %127 = math.exp %126 : vector<8x256xf32>
      %128 = math.log1p %127 : vector<8x256xf32>
      %129 = arith.select %124, %122, %128 : vector<8x256xi1>, vector<8x256xf32>
      %c0_59 = arith.constant 0 : index
      %c0_60 = arith.constant 0 : index
      %130 = vector.load %arg9[%c0_59, %c0_60] : memref<256x128xf32, #tpu.memory_space<vmem>>, vector<256x128xf32>
      %cst_61 = arith.constant dense<0.000000e+00> : vector<8x128xf32>
      %131 = tpu.matmul %129, %130, %cst_61 {dimension_numbers = #tpu.dot_dimension_numbers<[1], [0], [0], [1], [0, 0, 1, 1], [], []>} : vector<8x256xf32>, vector<256x128xf32>, vector<8x128xf32> -> vector<8x128xf32>
      %c0_62 = arith.constant 0 : index
      %c0_63 = arith.constant 0 : index
      %132 = vector.load %arg10[%c0_62, %c0_63] : memref<1x128xf32, #tpu.memory_space<vmem>>, vector<1x128xf32>
      %133 = vector.broadcast %132 : vector<1x128xf32> to vector<8x128xf32>
      %134 = arith.addf %131, %133 : vector<8x128xf32>
      %135 = vector.broadcast %11 : f32 to vector<8x128xf32>
      %136 = arith.mulf %135, %134 : vector<8x128xf32>
      %137 = arith.addf %12, %136 : vector<8x128xf32>
      %c0_64 = arith.constant 0 : index
      %c0_65 = arith.constant 0 : index
      %138 = vector.load %arg6[%c0_64, %c0_65] : memref<1x256xf32, #tpu.memory_space<vmem>>, vector<1x256xf32>
      %139 = vector.extract_strided_slice %137 {offsets = [0, 0], sizes = [8, 1], strides = [1, 1]} : vector<8x128xf32> to vector<8x1xf32>
      %c0_66 = arith.constant 0 : index
      %c0_67 = arith.constant 0 : index
      %140 = vector.load %arg5[%c0_66, %c0_67] : memref<2x256xf32, #tpu.memory_space<vmem>>, vector<1x256xf32>
      %141 = vector.broadcast %139 : vector<8x1xf32> to vector<8x256xf32>
      %142 = vector.broadcast %140 : vector<1x256xf32> to vector<8x256xf32>
      %143 = arith.mulf %141, %142 : vector<8x256xf32>
      %144 = vector.broadcast %138 : vector<1x256xf32> to vector<8x256xf32>
      %145 = arith.addf %144, %143 : vector<8x256xf32>
      %146 = vector.extract_strided_slice %137 {offsets = [0, 1], sizes = [8, 1], strides = [1, 1]} : vector<8x128xf32> to vector<8x1xf32>
      %c1_68 = arith.constant 1 : index
      %c0_69 = arith.constant 0 : index
      %147 = vector.load %arg5[%c1_68, %c0_69] : memref<2x256xf32, #tpu.memory_space<vmem>>, vector<1x256xf32>
      %148 = vector.broadcast %146 : vector<8x1xf32> to vector<8x256xf32>
      %149 = vector.broadcast %147 : vector<1x256xf32> to vector<8x256xf32>
      %150 = arith.mulf %148, %149 : vector<8x256xf32>
      %151 = arith.addf %145, %150 : vector<8x256xf32>
      %cst_70 = arith.constant 2.000000e+01 : f32
      %152 = vector.broadcast %cst_70 : f32 to vector<8x256xf32>
      %153 = arith.cmpf ogt, %151, %152 : vector<8x256xf32>
      %cst_71 = arith.constant 2.000000e+01 : f32
      %154 = vector.broadcast %cst_71 : f32 to vector<8x256xf32>
      %155 = arith.minimumf %151, %154 : vector<8x256xf32>
      %156 = math.exp %155 : vector<8x256xf32>
      %157 = math.log1p %156 : vector<8x256xf32>
      %158 = arith.select %153, %151, %157 : vector<8x256xi1>, vector<8x256xf32>
      %c0_72 = arith.constant 0 : index
      %c0_73 = arith.constant 0 : index
      %159 = vector.load %arg7[%c0_72, %c0_73] : memref<256x256xf32, #tpu.memory_space<vmem>>, vector<256x256xf32>
      %cst_74 = arith.constant dense<0.000000e+00> : vector<8x256xf32>
      %160 = tpu.matmul %158, %159, %cst_74 {dimension_numbers = #tpu.dot_dimension_numbers<[1], [0], [0], [1], [0, 0, 1, 1], [], []>} : vector<8x256xf32>, vector<256x256xf32>, vector<8x256xf32> -> vector<8x256xf32>
      %c0_75 = arith.constant 0 : index
      %c0_76 = arith.constant 0 : index
      %161 = vector.load %arg8[%c0_75, %c0_76] : memref<1x256xf32, #tpu.memory_space<vmem>>, vector<1x256xf32>
      %162 = vector.broadcast %161 : vector<1x256xf32> to vector<8x256xf32>
      %163 = arith.addf %160, %162 : vector<8x256xf32>
      %cst_77 = arith.constant 2.000000e+01 : f32
      %164 = vector.broadcast %cst_77 : f32 to vector<8x256xf32>
      %165 = arith.cmpf ogt, %163, %164 : vector<8x256xf32>
      %cst_78 = arith.constant 2.000000e+01 : f32
      %166 = vector.broadcast %cst_78 : f32 to vector<8x256xf32>
      %167 = arith.minimumf %163, %166 : vector<8x256xf32>
      %168 = math.exp %167 : vector<8x256xf32>
      %169 = math.log1p %168 : vector<8x256xf32>
      %170 = arith.select %165, %163, %169 : vector<8x256xi1>, vector<8x256xf32>
      %c0_79 = arith.constant 0 : index
      %c0_80 = arith.constant 0 : index
      %171 = vector.load %arg9[%c0_79, %c0_80] : memref<256x128xf32, #tpu.memory_space<vmem>>, vector<256x128xf32>
      %cst_81 = arith.constant dense<0.000000e+00> : vector<8x128xf32>
      %172 = tpu.matmul %170, %171, %cst_81 {dimension_numbers = #tpu.dot_dimension_numbers<[1], [0], [0], [1], [0, 0, 1, 1], [], []>} : vector<8x256xf32>, vector<256x128xf32>, vector<8x128xf32> -> vector<8x128xf32>
      %c0_82 = arith.constant 0 : index
      %c0_83 = arith.constant 0 : index
      %173 = vector.load %arg10[%c0_82, %c0_83] : memref<1x128xf32, #tpu.memory_space<vmem>>, vector<1x128xf32>
      %174 = vector.broadcast %173 : vector<1x128xf32> to vector<8x128xf32>
      %175 = arith.addf %172, %174 : vector<8x128xf32>
      %cst_84 = arith.constant 6.000000e+00 : f32
      %176 = arith.divf %11, %cst_84 : f32
      %177 = arith.addf %92, %134 : vector<8x128xf32>
      %cst_85 = arith.constant 2.000000e+00 : f32
      %178 = vector.broadcast %cst_85 : f32 to vector<8x128xf32>
      %179 = arith.mulf %178, %177 : vector<8x128xf32>
      %180 = arith.addf %50, %179 : vector<8x128xf32>
      %181 = arith.addf %180, %175 : vector<8x128xf32>
      %182 = vector.broadcast %176 : f32 to vector<8x128xf32>
      %183 = arith.mulf %182, %181 : vector<8x128xf32>
      %184 = arith.addf %12, %183 : vector<8x128xf32>
      %c0_86 = arith.constant 0 : index
      %c0_87 = arith.constant 0 : index
      %185 = vector.load %arg12[%c0_86, %c0_87] : memref<8x128xf32, #tpu.memory_space<vmem>>, vector<8x128xf32>
      tpu.vector_store %arg12[%c0_86, %c0_87], %184 {strides = array<i32>} : memref<8x128xf32, #tpu.memory_space<vmem>>, vector<8x128xf32>,
      %c0_88 = arith.constant 0 : index
      %c0_89 = arith.constant 0 : index
      %c0_90 = arith.constant 0 : index
      %186 = vector.load %arg11[%c0_88, %c0_89, %c0_90] : memref<1x8x128xf32, #tpu.memory_space<vmem>>, vector<1x8x128xf32>
      %187 = vector.shape_cast %186 : vector<1x8x128xf32> to vector<8x128xf32>
      %188 = vector.shape_cast %184 : vector<8x128xf32> to vector<1x8x128xf32>
      tpu.vector_store %arg11[%c0_88, %c0_89, %c0_90], %188 {strides = array<i32>} : memref<1x8x128xf32, #tpu.memory_space<vmem>>, vector<1x8x128xf32>,
    } else {
    }
    return
  }
  func.func @transform_0(%arg0: i32, %arg1: i32) -> i32 {
    %c0_i32 = arith.constant 0 : i32
    %c0_i32_0 = arith.constant 0 : i32
    return %c0_i32 : i32
  }
  func.func @transform_1(%arg0: i32, %arg1: i32) -> i32 {
    %c0_i32 = arith.constant 0 : i32
    %c0_i32_0 = arith.constant 0 : i32
    return %c0_i32 : i32
  }
  func.func @transform_2(%arg0: i32, %arg1: i32) -> (i32, i32) {
    %c0_i32 = arith.constant 0 : i32
    %c0_i32_0 = arith.constant 0 : i32
    %c0_i32_1 = arith.constant 0 : i32
    return %c0_i32, %c0_i32_0 : i32, i32
  }
  func.func @transform_3(%arg0: i32, %arg1: i32) -> (i32, i32) {
    %c0_i32 = arith.constant 0 : i32
    %c0_i32_0 = arith.constant 0 : i32
    %c0_i32_1 = arith.constant 0 : i32
    return %c0_i32, %c0_i32_0 : i32, i32
  }
  func.func @transform_4(%arg0: i32, %arg1: i32) -> (i32, i32) {
    %c0_i32 = arith.constant 0 : i32
    %c0_i32_0 = arith.constant 0 : i32
    %c0_i32_1 = arith.constant 0 : i32
    return %c0_i32, %c0_i32_0 : i32, i32
  }
  func.func @transform_5(%arg0: i32, %arg1: i32) -> (i32, i32) {
    %c0_i32 = arith.constant 0 : i32
    %c0_i32_0 = arith.constant 0 : i32
    %c0_i32_1 = arith.constant 0 : i32
    return %c0_i32, %c0_i32_0 : i32, i32
  }
  func.func @transform_6(%arg0: i32, %arg1: i32) -> (i32, i32) {
    %c0_i32 = arith.constant 0 : i32
    %c0_i32_0 = arith.constant 0 : i32
    %c0_i32_1 = arith.constant 0 : i32
    return %c0_i32, %c0_i32_0 : i32, i32
  }
  func.func @transform_7(%arg0: i32, %arg1: i32) -> (i32, i32) {
    %c0_i32 = arith.constant 0 : i32
    %c0_i32_0 = arith.constant 0 : i32
    %c0_i32_1 = arith.constant 0 : i32
    return %c0_i32, %c0_i32_0 : i32, i32
  }
  func.func @transform_8(%arg0: i32, %arg1: i32) -> (i32, i32) {
    %c0_i32 = arith.constant 0 : i32
    %c0_i32_0 = arith.constant 0 : i32
    %c0_i32_1 = arith.constant 0 : i32
    return %c0_i32, %c0_i32_0 : i32, i32
  }
  func.func @transform_9(%arg0: i32, %arg1: i32) -> (i32, i32, i32) {
    %c0_i32 = arith.constant 0 : i32
    %c0_i32_0 = arith.constant 0 : i32
    %c0_i32_1 = arith.constant 0 : i32
    return %arg0, %c0_i32, %c0_i32_0 : i32, i32, i32
  }
}

</mosaic_0001>

<llo_original>
// kernel: tpu_custom_call.1
$region0: #{tpu_custom_call.1}
  #allocation0 [shape = 'u32[]', space=smem, size = 0x4, offset = 0x4, fixed_abs, tag = 'smem constant byte address 0x4 - core index']
  #allocation1 [shape = 'u32[72,128]{1,0:T(1,128)}', space=vmem, size = 0x9000, scoped, tag = 'internal scratch']
  #allocation2 [shape = 'f32[8,128]{1,0:T(8,128)}', space=vmem, size = 0x1000, scoped, tag = 'scratch operand']
  %s0 = inlined_call_operand.hbm [shape: s32[3], index: 0, kind: input, shape index: {}]
  %s1 = inlined_call_operand.hbm [shape: f32[3], index: 1, kind: input, shape index: {}]
  %s2 = inlined_call_operand.hbm [shape: f32[8,128], index: 2, kind: input, shape index: {}]
  %s3 = inlined_call_operand.hbm [shape: f32[2,256], index: 3, kind: input, shape index: {}]
  %s4 = inlined_call_operand.vmem [shape: f32[1,256], index: 4, kind: input, shape index: {}]
  %s5 = inlined_call_operand.hbm [shape: f32[256,256], index: 5, kind: input, shape index: {}]
  %s6 = inlined_call_operand.vmem [shape: f32[1,256], index: 6, kind: input, shape index: {}]
  %s7 = inlined_call_operand.hbm [shape: f32[256,128], index: 7, kind: input, shape index: {}]
  %s8 = inlined_call_operand.vmem [shape: f32[1,128], index: 8, kind: input, shape index: {}]
  %s9 = inlined_call_operand.hbm [shape: f32[3,8,128], index: 9, kind: output, shape index: {}]
  %s10 = sld [smem:[#allocation0]]
  $region101: #{tpu_custom_call.1} parent=0
    _
  %s12 = ssub.s32 1, %s10
  %s13 = scalar_select 0, %s12, %s10
  $region1: #{tpu_custom_call.1} parent=0
    #allocation3 [shape = 'u8[512]{0}', space=smem, size = 0x200, scoped, tag = 'input window, operand 0, single buffered']
    #allocation4 [shape = 's32[2]{0}', space=sflag, size = 0x8, scoped, tag = 'scoped memory for tpu_custom_call.1']
    #allocation5 [shape = 's32[2]{0}', space=sflag, size = 0x8, scoped, tag = 'scoped memory for tpu_custom_call.1']
    #allocation6 [shape = 's32[2]{0}', space=sflag, size = 0x8, scoped, tag = 'scoped memory for tpu_custom_call.1']
    #allocation7 [shape = 'u8[512]{0}', space=smem, size = 0x200, scoped, tag = 'input window, operand 1, single buffered']
    #allocation8 [shape = 's32[1]{0}', space=sflag, size = 0x4, scoped, tag = 'scoped memory for tpu_custom_call.1']
    #allocation9 [shape = 'u8[4096]{0}', space=vmem, size = 0x1000, scoped, tag = 'input window, operand 2, single buffered']
    #allocation10 [shape = 'u8[2048]{0}', space=vmem, size = 0x800, scoped, tag = 'input window, operand 3, single buffered']
    #allocation11 [shape = 's32[1]{0}', space=sflag, size = 0x4, scoped, tag = 'scoped memory for tpu_custom_call.1']
    #allocation12 [shape = 'u8[262144]{0}', space=vmem, size = 0x40000, scoped, tag = 'input window, operand 5, single buffered']
    #allocation13 [shape = 'u8[131072]{0}', space=vmem, size = 0x20000, scoped, tag = 'input window, operand 7, single buffered']
    #allocation14 [shape = 's32[1]{0}', space=sflag, size = 0x4, scoped, tag = 'scoped memory for tpu_custom_call.1']
    #allocation15 [shape = 'u8[8192]{0}', space=vmem, size = 0x2000, scoped, tag = 'output window, operand 0']
    %14 = vsyncpa [#allocation6], 0
    %15 = vsyncpa [#allocation8], 0
    %16 = vsyncpa [#allocation4], 0
    %17 = vsyncpa [#allocation11], 0
    %18 = vsyncpa [#allocation14], 0
    %19 = vsyncpa [#allocation5], 0
    %s20 = scalar_lea.sflag [#allocation5], 1
    %21 = vsyncpa %s20, 0
    loop: start=0, step=1, limit=26
    $region2: #{tpu_custom_call.1} parent=1 // loop_pre_header
      _
    $region3: #{tpu_custom_call.1} parent=1 // loop_header
      %s23 = sphi 0, %s27
      %p24 = scmp.ge.s32.totalorder %s23, 26
      %s30 = sphi 0, %s42
      %s31 = sphi 0, %s38
      %s32 = sphi 0, %s30
      %s33 = sphi 0, %s31
      %s34 = sphi 0, %s32
      %s35 = sphi 0, %s33
      %s43 = sphi 0, %s43
      %s45 = sphi 0, %s43
      %s46 = sphi 0, %s45
      %s60 = sphi 0, %s46
      %s64 = sphi 0, %s64
      %s66 = sphi 0, %s64
      %s67 = sphi 0, %s66
      %s81 = sphi 0, %s67
      %s85 = sphi 0, %s85
      %s87 = sphi 0, %s85
      %s88 = sphi 0, %s87
      %s102 = sphi 0, %s88
      %s106 = sphi 0, %s106
      %s108 = sphi 0, %s106
      %s109 = sphi 0, %s108
      %s123 = sphi 0, %s109
      %s127 = sphi 0, %s127
      %s129 = sphi 0, %s127
      %s130 = sphi 0, %s129
      %s144 = sphi 0, %s130
      %s148 = sphi 0, %s148
      %s150 = sphi 0, %s148
      %s151 = sphi 0, %s150
      %s165 = sphi 0, %s151
      %s169 = sphi 0, %s169
      %s171 = sphi 0, %s169
      %s172 = sphi 0, %s171
      %s186 = sphi 0, %s172
      %s190 = sphi 0, %s190
      %s192 = sphi 0, %s190
      %s193 = sphi 0, %s192
      %s207 = sphi 0, %s193
      %s211 = sphi 0, %s211
      %s213 = sphi 0, %s211
      %s214 = sphi 0, %s213
      %s228 = sphi 0, %s214
      %s234 = sphi 0, %s236
      %s237 = sphi 0, %s234
      %s238 = sphi 0, %s237
      %s254 = sphi 0, %s238
    $region4: #{tpu_custom_call.1} parent=1 // loop_header_branch
      %26 = sbr.rel (%p24) target = $region8
    $region5: #{tpu_custom_call.1} parent=1 // loop_body
      %s28 = ssub.s32 %s23, 1
      %s29 = ssub.s32 %s23, 2
      %s36 = sadd.s32 1, %s31
      %p37 = scmp.ge.s32.totalorder %s36, 8
      %s38 = scalar_select %p37, 0, %s36
      %s39 = sadd.s32 1, %s30
      %s40 = scalar_select %p37, %s39, %s30
      %p41 = scmp.ge.s32.totalorder %s40, 3
      %s42 = scalar_select %p41, 0, %s40
      %s44 = sadd.s32 %s43, 1
      %p47 = scmp.eq.s32.totalorder %s23, 23
      %p48 = scmp.ne.s32.totalorder %s43, %s45
      %p49 = scmp.eq.s32.totalorder %s23, 0
      %p50 = por %p48, %p49
      %p51 = scmp.ne.s32.totalorder %s43, %s45
      %p52 = scmp.eq.s32.totalorder %s28, 23
      %p53 = por %p51, %p52
      %p54 = scmp.ne.s32.totalorder %s45, %s46
      %p55 = scmp.eq.s32.totalorder %s28, 0
      %p56 = por %p54, %p55
      %p57 = scmp.ne.s32.totalorder %s45, %s46
      %p58 = scmp.eq.s32.totalorder %s29, 23
      %p59 = por %p57, %p58
      %p61 = scmp.ne.s32.totalorder %s46, %s60
      %p62 = scmp.eq.s32.totalorder %s29, 0
      %p63 = por %p61, %p62
      %s65 = sadd.s32 %s64, 1
      %p68 = scmp.eq.s32.totalorder %s23, 23
      %p69 = scmp.ne.s32.totalorder %s64, %s66
      %p70 = scmp.eq.s32.totalorder %s23, 0
      %p71 = por %p69, %p70
      %p72 = scmp.ne.s32.totalorder %s64, %s66
      %p73 = scmp.eq.s32.totalorder %s28, 23
      %p74 = por %p72, %p73
      %p75 = scmp.ne.s32.totalorder %s66, %s67
      %p76 = scmp.eq.s32.totalorder %s28, 0
      %p77 = por %p75, %p76
      %p78 = scmp.ne.s32.totalorder %s66, %s67
      %p79 = scmp.eq.s32.totalorder %s29, 23
      %p80 = por %p78, %p79
      %p82 = scmp.ne.s32.totalorder %s67, %s81
      %p83 = scmp.eq.s32.totalorder %s29, 0
      %p84 = por %p82, %p83
      %s86 = sadd.s32 %s85, 1
      %p89 = scmp.eq.s32.totalorder %s23, 23
      %p90 = scmp.ne.s32.totalorder %s85, %s87
      %p91 = scmp.eq.s32.totalorder %s23, 0
      %p92 = por %p90, %p91
      %p93 = scmp.ne.s32.totalorder %s85, %s87
      %p94 = scmp.eq.s32.totalorder %s28, 23
      %p95 = por %p93, %p94
      %p96 = scmp.ne.s32.totalorder %s87, %s88
      %p97 = scmp.eq.s32.totalorder %s28, 0
      %p98 = por %p96, %p97
      %p99 = scmp.ne.s32.totalorder %s87, %s88
      %p100 = scmp.eq.s32.totalorder %s29, 23
      %p101 = por %p99, %p100
      %p103 = scmp.ne.s32.totalorder %s88, %s102
      %p104 = scmp.eq.s32.totalorder %s29, 0
      %p105 = por %p103, %p104
      %s107 = sadd.s32 %s106, 1
      %p110 = scmp.eq.s32.totalorder %s23, 23
      %p111 = scmp.ne.s32.totalorder %s106, %s108
      %p112 = scmp.eq.s32.totalorder %s23, 0
      %p113 = por %p111, %p112
      %p114 = scmp.ne.s32.totalorder %s106, %s108
      %p115 = scmp.eq.s32.totalorder %s28, 23
      %p116 = por %p114, %p115
      %p117 = scmp.ne.s32.totalorder %s108, %s109
      %p118 = scmp.eq.s32.totalorder %s28, 0
      %p119 = por %p117, %p118
      %p120 = scmp.ne.s32.totalorder %s108, %s109
      %p121 = scmp.eq.s32.totalorder %s29, 23
      %p122 = por %p120, %p121
      %p124 = scmp.ne.s32.totalorder %s109, %s123
      %p125 = scmp.eq.s32.totalorder %s29, 0
      %p126 = por %p124, %p125
      %s128 = sadd.s32 %s127, 1
      %p131 = scmp.eq.s32.totalorder %s23, 23
      %p132 = scmp.ne.s32.totalorder %s127, %s129
      %p133 = scmp.eq.s32.totalorder %s23, 0
      %p134 = por %p132, %p133
      %p135 = scmp.ne.s32.totalorder %s127, %s129
      %p136 = scmp.eq.s32.totalorder %s28, 23
      %p137 = por %p135, %p136
      %p138 = scmp.ne.s32.totalorder %s129, %s130
      %p139 = scmp.eq.s32.totalorder %s28, 0
      %p140 = por %p138, %p139
      %p141 = scmp.ne.s32.totalorder %s129, %s130
      %p142 = scmp.eq.s32.totalorder %s29, 23
      %p143 = por %p141, %p142
      %p145 = scmp.ne.s32.totalorder %s130, %s144
      %p146 = scmp.eq.s32.totalorder %s29, 0
      %p147 = por %p145, %p146
      %s149 = sadd.s32 %s148, 1
      %p152 = scmp.eq.s32.totalorder %s23, 23
      %p153 = scmp.ne.s32.totalorder %s148, %s150
      %p154 = scmp.eq.s32.totalorder %s23, 0
      %p155 = por %p153, %p154
      %p156 = scmp.ne.s32.totalorder %s148, %s150
      %p157 = scmp.eq.s32.totalorder %s28, 23
      %p158 = por %p156, %p157
      %p159 = scmp.ne.s32.totalorder %s150, %s151
      %p160 = scmp.eq.s32.totalorder %s28, 0
      %p161 = por %p159, %p160
      %p162 = scmp.ne.s32.totalorder %s150, %s151
      %p163 = scmp.eq.s32.totalorder %s29, 23
      %p164 = por %p162, %p163
      %p166 = scmp.ne.s32.totalorder %s151, %s165
      %p167 = scmp.eq.s32.totalorder %s29, 0
      %p168 = por %p166, %p167
      %s170 = sadd.s32 %s169, 1
      %p173 = scmp.eq.s32.totalorder %s23, 23
      %p174 = scmp.ne.s32.totalorder %s169, %s171
      %p175 = scmp.eq.s32.totalorder %s23, 0
      %p176 = por %p174, %p175
      %p177 = scmp.ne.s32.totalorder %s169, %s171
      %p178 = scmp.eq.s32.totalorder %s28, 23
      %p179 = por %p177, %p178
      %p180 = scmp.ne.s32.totalorder %s171, %s172
      %p181 = scmp.eq.s32.totalorder %s28, 0
      %p182 = por %p180, %p181
      %p183 = scmp.ne.s32.totalorder %s171, %s172
      %p184 = scmp.eq.s32.totalorder %s29, 23
      %p185 = por %p183, %p184
      %p187 = scmp.ne.s32.totalorder %s172, %s186
      %p188 = scmp.eq.s32.totalorder %s29, 0
      %p189 = por %p187, %p188
      %s191 = sadd.s32 %s190, 1
      %p194 = scmp.eq.s32.totalorder %s23, 23
      %p195 = scmp.ne.s32.totalorder %s190, %s192
      %p196 = scmp.eq.s32.totalorder %s23, 0
      %p197 = por %p195, %p196
      %p198 = scmp.ne.s32.totalorder %s190, %s192
      %p199 = scmp.eq.s32.totalorder %s28, 23
      %p200 = por %p198, %p199
      %p201 = scmp.ne.s32.totalorder %s192, %s193
      %p202 = scmp.eq.s32.totalorder %s28, 0
      %p203 = por %p201, %p202
      %p204 = scmp.ne.s32.totalorder %s192, %s193
      %p205 = scmp.eq.s32.totalorder %s29, 23
      %p206 = por %p204, %p205
      %p208 = scmp.ne.s32.totalorder %s193, %s207
      %p209 = scmp.eq.s32.totalorder %s29, 0
      %p210 = por %p208, %p209
      %s212 = sadd.s32 %s211, 1
      %p215 = scmp.eq.s32.totalorder %s23, 23
      %p216 = scmp.ne.s32.totalorder %s211, %s213
      %p217 = scmp.eq.s32.totalorder %s23, 0
      %p218 = por %p216, %p217
      %p219 = scmp.ne.s32.totalorder %s211, %s213
      %p220 = scmp.eq.s32.totalorder %s28, 23
      %p221 = por %p219, %p220
      %p222 = scmp.ne.s32.totalorder %s213, %s214
      %p223 = scmp.eq.s32.totalorder %s28, 0
      %p224 = por %p222, %p223
      %p225 = scmp.ne.s32.totalorder %s213, %s214
      %p226 = scmp.eq.s32.totalorder %s29, 23
      %p227 = por %p225, %p226
      %p229 = scmp.ne.s32.totalorder %s214, %s228
      %p230 = scmp.eq.s32.totalorder %s29, 0
      %p231 = por %p229, %p230
      %s232 = ssub.s32 %s30, %s42
      %p233 = scmp.eq.s32.totalorder %s232, 0
      %s235 = sadd.s32 %s234, 1
      %s236 = scalar_select %p233, %s234, %s235
      %p239 = pneg %p233
      %p240 = scmp.eq.s32.totalorder %s23, 23
      %p241 = por %p239, %p240
      %p242 = scmp.ne.s32.totalorder %s234, %s237
      %p243 = scmp.eq.s32.totalorder %s23, 0
      %p244 = por %p242, %p243
      %p245 = scmp.ne.s32.totalorder %s234, %s237
      %p246 = scmp.eq.s32.totalorder %s28, 23
      %p247 = por %p245, %p246
      %p248 = scmp.ne.s32.totalorder %s237, %s238
      %p249 = scmp.eq.s32.totalorder %s28, 0
      %p250 = por %p248, %p249
      %p251 = scmp.ne.s32.totalorder %s237, %s238
      %p252 = scmp.eq.s32.totalorder %s29, 23
      %p253 = por %p251, %p252
      %p255 = scmp.ne.s32.totalorder %s238, %s254
      %p256 = scmp.eq.s32.totalorder %s29, 0
      %p257 = por %p255, %p256
      %p258 = scmp.le.s32.totalorder 1, %s23
      %p259 = scmp.lt.s32.totalorder %s23, 25
      %p260 = pnand %p258, %p259
      %p261 = pneg %p260
      // Predicated region
      $region9: #{tpu_custom_call.1} parent=5 // pred_check
        _
      $region10: #{tpu_custom_call.1} parent=5 // pred_check_branch
        %263 = sbr.rel (%p260) target = $region12
      $region11: #{tpu_custom_call.1} parent=5 // pred_region
        %s264 = ssub.s32 %s23, 1
        // Predicated region
        $region13: #{tpu_custom_call.1} parent=11 // pred_check
          %p265 = pneg %p56
        $region14: #{tpu_custom_call.1} parent=11 // pred_check_branch
          %267 = sbr.rel (%p265) target = $region16
        $region15: #{tpu_custom_call.1} parent=11 // pred_region
          %269 = vsyncadd [#allocation6], 0
          %s271 = sshll.u32 %s0, 4
          %s272 = int_to_ptr.hbm [resolvable:$true] %s271
          %274 = dma.hbm_to_smem %s272, 16, [#allocation3], [#allocation6]
        $region16: #{tpu_custom_call.1} parent=11 // pred_fallthru
          _
        // Predicated region
        $region17: #{tpu_custom_call.1} parent=11 // pred_check
          %p275 = pneg %p77
        $region18: #{tpu_custom_call.1} parent=11 // pred_check_branch
          %277 = sbr.rel (%p275) target = $region20
        $region19: #{tpu_custom_call.1} parent=11 // pred_region
          %279 = vsyncadd [#allocation8], 0
          %s281 = sshll.u32 %s1, 4
          %s282 = int_to_ptr.hbm [resolvable:$true] %s281
          %284 = dma.hbm_to_smem %s282, 16, [#allocation7], [#allocation8]
        $region20: #{tpu_custom_call.1} parent=11 // pred_fallthru
          _
        // Predicated region
        $region21: #{tpu_custom_call.1} parent=11 // pred_check
          %p285 = pneg %p98
        $region22: #{tpu_custom_call.1} parent=11 // pred_check_branch
          %287 = sbr.rel (%p285) target = $region24
        $region23: #{tpu_custom_call.1} parent=11 // pred_region
          %289 = vsyncadd [#allocation4], 0
          %s291 = sshll.u32 %s2, 4
          %s292 = int_to_ptr.hbm [resolvable:$true] %s291
          %s293 = sshll.u32 [#allocation9], 4
          %s294 = int_to_ptr.vmem [resolvable:$true] %s293
          %296 = dma.hbm_to_vmem [thread:$0]  %s292, 128, %s294, [#allocation4]
        $region24: #{tpu_custom_call.1} parent=11 // pred_fallthru
          _
        // Predicated region
        $region25: #{tpu_custom_call.1} parent=11 // pred_check
          %p297 = pneg %p119
        $region26: #{tpu_custom_call.1} parent=11 // pred_check_branch
          %299 = sbr.rel (%p297) target = $region28
        $region27: #{tpu_custom_call.1} parent=11 // pred_region
          %301 = vsyncadd [#allocation11], 0
          %s303 = sshll.u32 %s3, 4
          %s304 = int_to_ptr.hbm [resolvable:$true] %s303
          %s305 = sshll.u32 [#allocation10], 4
          %s306 = int_to_ptr.vmem [resolvable:$true] %s305
          %308 = dma.hbm_to_vmem [thread:$0]  %s304, 64, %s306, [#allocation11]
        $region28: #{tpu_custom_call.1} parent=11 // pred_fallthru
          _
        // Predicated region
        $region29: #{tpu_custom_call.1} parent=11 // pred_check
          %p309 = pneg %p140
        $region30: #{tpu_custom_call.1} parent=11 // pred_check_branch
          %311 = sbr.rel (%p309) target = $region32
        $region31: #{tpu_custom_call.1} parent=11 // pred_region
          _
        $region32: #{tpu_custom_call.1} parent=11 // pred_fallthru
          _
        // Predicated region
        $region33: #{tpu_custom_call.1} parent=11 // pred_check
          %p312 = pneg %p161
        $region34: #{tpu_custom_call.1} parent=11 // pred_check_branch
          %314 = sbr.rel (%p312) target = $region36
        $region35: #{tpu_custom_call.1} parent=11 // pred_region
          %316 = vsyncadd [#allocation11], 0
          %s317 = sshll.u32 %s5, 4
          %s318 = int_to_ptr.hbm [resolvable:$true] %s317
          %s319 = sshll.u32 [#allocation12], 4
          %s320 = int_to_ptr.vmem [resolvable:$true] %s319
          %325 = dma.hbm_to_vmem [thread:$0]  %s318, 8192, %s320, [#allocation11], 256, 256, 16
        $region36: #{tpu_custom_call.1} parent=11 // pred_fallthru
          _
        // Predicated region
        $region37: #{tpu_custom_call.1} parent=11 // pred_check
          %p326 = pneg %p182
        $region38: #{tpu_custom_call.1} parent=11 // pred_check_branch
          %328 = sbr.rel (%p326) target = $region40
        $region39: #{tpu_custom_call.1} parent=11 // pred_region
          _
        $region40: #{tpu_custom_call.1} parent=11 // pred_fallthru
          _
        // Predicated region
        $region41: #{tpu_custom_call.1} parent=11 // pred_check
          %p329 = pneg %p203
        $region42: #{tpu_custom_call.1} parent=11 // pred_check_branch
          %331 = sbr.rel (%p329) target = $region44
        $region43: #{tpu_custom_call.1} parent=11 // pred_region
          %333 = vsyncadd [#allocation14], 0
          %s334 = sshll.u32 %s7, 4
          %s335 = int_to_ptr.hbm [resolvable:$true] %s334
          %s336 = sshll.u32 [#allocation13], 4
          %s337 = int_to_ptr.vmem [resolvable:$true] %s336
          %342 = dma.hbm_to_vmem [thread:$0]  %s335, 4096, %s337, [#allocation14], 128, 128, 8
        $region44: #{tpu_custom_call.1} parent=11 // pred_fallthru
          _
        // Predicated region
        $region45: #{tpu_custom_call.1} parent=11 // pred_check
          %p343 = pneg %p224
        $region46: #{tpu_custom_call.1} parent=11 // pred_check_branch
          %345 = sbr.rel (%p343) target = $region48
        $region47: #{tpu_custom_call.1} parent=11 // pred_region
          _
        $region48: #{tpu_custom_call.1} parent=11 // pred_fallthru
          _
      $region12: #{tpu_custom_call.1} parent=5 // pred_fallthru
        _
      %p346 = scmp.lt.s32.totalorder %s23, 24
      // Predicated region
      $region49: #{tpu_custom_call.1} parent=5 // pred_check
        %p347 = pneg %p346
      $region50: #{tpu_custom_call.1} parent=5 // pred_check_branch
        %349 = sbr.rel (%p347) target = $region52
      $region51: #{tpu_custom_call.1} parent=5 // pred_region
        _
      $region52: #{tpu_custom_call.1} parent=5 // pred_fallthru
        _
      %p350 = scmp.le.s32.totalorder 1, %s23
      %p351 = scmp.lt.s32.totalorder %s23, 25
      %p352 = pnand %p350, %p351
      %p353 = pneg %p352
      // Predicated region
      $region53: #{tpu_custom_call.1} parent=5 // pred_check
        _
      $region54: #{tpu_custom_call.1} parent=5 // pred_check_branch
        %355 = sbr.rel (%p352) target = $region56
      $region55: #{tpu_custom_call.1} parent=5 // pred_region
        %s356 = ssub.s32 %s23, 1
        // Predicated region
        $region57: #{tpu_custom_call.1} parent=55 // pred_check
          %p357 = pneg %p56
        $region58: #{tpu_custom_call.1} parent=55 // pred_check_branch
          %359 = sbr.rel (%p357) target = $region60
        $region59: #{tpu_custom_call.1} parent=55 // pred_region
          %361 = dma.done [#allocation6], 16
        $region60: #{tpu_custom_call.1} parent=55 // pred_fallthru
          _
        // Predicated region
        $region61: #{tpu_custom_call.1} parent=55 // pred_check
          %p362 = pneg %p77
        $region62: #{tpu_custom_call.1} parent=55 // pred_check_branch
          %364 = sbr.rel (%p362) target = $region64
        $region63: #{tpu_custom_call.1} parent=55 // pred_region
          %366 = dma.done [#allocation8], 16
        $region64: #{tpu_custom_call.1} parent=55 // pred_fallthru
          _
        // Predicated region
        $region65: #{tpu_custom_call.1} parent=55 // pred_check
          %p367 = pneg %p98
        $region66: #{tpu_custom_call.1} parent=55 // pred_check_branch
          %369 = sbr.rel (%p367) target = $region68
        $region67: #{tpu_custom_call.1} parent=55 // pred_region
          %371 = dma.done [#allocation4], 128
        $region68: #{tpu_custom_call.1} parent=55 // pred_fallthru
          _
        // Predicated region
        $region69: #{tpu_custom_call.1} parent=55 // pred_check
          %p372 = pneg %p119
        $region70: #{tpu_custom_call.1} parent=55 // pred_check_branch
          %374 = sbr.rel (%p372) target = $region72
        $region71: #{tpu_custom_call.1} parent=55 // pred_region
          %376 = dma.done [#allocation11], 64
        $region72: #{tpu_custom_call.1} parent=55 // pred_fallthru
          _
        // Predicated region
        $region73: #{tpu_custom_call.1} parent=55 // pred_check
          %p377 = pneg %p161
        $region74: #{tpu_custom_call.1} parent=55 // pred_check_branch
          %379 = sbr.rel (%p377) target = $region76
        $region75: #{tpu_custom_call.1} parent=55 // pred_region
          %381 = dma.done [#allocation11], 8192
        $region76: #{tpu_custom_call.1} parent=55 // pred_fallthru
          _
        // Predicated region
        $region77: #{tpu_custom_call.1} parent=55 // pred_check
          %p382 = pneg %p203
        $region78: #{tpu_custom_call.1} parent=55 // pred_check_branch
          %384 = sbr.rel (%p382) target = $region80
        $region79: #{tpu_custom_call.1} parent=55 // pred_region
          %386 = dma.done [#allocation14], 4096
        $region80: #{tpu_custom_call.1} parent=55 // pred_fallthru
          _
        %387 = sfence
        %p388 = pneg %p56
        %p389 = pneg %p53
        %p390 = pneg %p77
        %p391 = pneg %p74
        %p392 = pneg %p98
        %p393 = pneg %p95
        %p394 = pneg %p119
        %p395 = pneg %p116
        %p396 = pneg %p140
        %p397 = pneg %p137
        %p398 = pneg %p161
        %p399 = pneg %p158
        %p400 = pneg %p182
        %p401 = pneg %p179
        %p402 = pneg %p203
        %p403 = pneg %p200
        %p404 = pneg %p224
        %p405 = pneg %p221
        %p406 = pneg %p250
        %p407 = pneg %p247
        %s408 = sand.u32 %s237, 1
        %s409 = scalar_lea.sflag [#allocation5], %s408
        %s410 = sand.u32 %s237, 1
        %s411 = smul.addr %s410, 8
        %s412 = scalar_lea.vmem [#allocation15], %s411
        %p413 = scmp.eq.s32.totalorder %s32, 0
        %p414 = scmp.eq.s32.totalorder %s33, 0
        %p415 = pnand %p413, %p414
        %p416 = pneg %p415
        // Predicated region
        $region81: #{tpu_custom_call.1} parent=55 // pred_check
          _
        $region82: #{tpu_custom_call.1} parent=55 // pred_check_branch
          %418 = sbr.rel (%p415) target = $region84
        $region83: #{tpu_custom_call.1} parent=55 // pred_region
          %v419 = vld [vmem:[#allocation9] sm:$0xff]
          %420 = vst [vmem:[#allocation2] sm:$0xff] %v419
        $region84: #{tpu_custom_call.1} parent=55 // pred_fallthru
          _
        %s421 = sld [smem:[#allocation3 + %s32]]
        %p422 = scmp.lt.s32.totalorder %s33, %s421
        // Predicated region
        $region85: #{tpu_custom_call.1} parent=55 // pred_check
          %p423 = pneg %p422
        $region86: #{tpu_custom_call.1} parent=55 // pred_check_branch
          %425 = sbr.rel (%p423) target = $region88
        $region87: #{tpu_custom_call.1} parent=55 // pred_region
          %s426 = sld [smem:[#allocation7 + %s32]]
          %v427 = vld [vmem:[#allocation2] sm:$0xff]
          %v428 = vld [vmem:[%s4] sm:$0x3]
          %v429 = vld [vmem:[#allocation10] ss:$2 sm:$0x3]
          %431 = vset.pattern.permute.xlu0 0
          %432 = vperm.xlu0 %431, %v427
          %v433 = vpop.permute.xlu0 %432
          %v436 = vperm.slane %v429, 0
          %v437 = vperm.slane %v429, 1
          %v440 = vmul.f32 %v433, %v436
          %v441 = vmul.f32 %v433, %v437
          %v443 = vperm.slane %v428, 0
          %v444 = vperm.slane %v428, 1
          %v447 = vadd.f32 %v443, %v440
          %v448 = vadd.f32 %v444, %v441
          %s449 = scalar_lea.vmem [#allocation10], 1
          %v450 = vld [vmem:[%s449] ss:$2 sm:$0x3]
          %451 = vset.pattern.permute.xlu0 1
          %452 = vperm.xlu0 %451, %v427
          %v453 = vpop.permute.xlu0 %452
          %v456 = vperm.slane %v450, 0
          %v457 = vperm.slane %v450, 1
          %v460 = vmul.f32 %v453, %v456
          %v461 = vmul.f32 %v453, %v457
          %v462 = vadd.f32 %v447, %v460
          %v463 = vadd.f32 %v448, %v461
          %vm464 = vcmp.gt.f32.partialorder %v462, 20.0
          %vm465 = vcmp.gt.f32.partialorder %v463, 20.0
          %v466 = vmin.f32 %v462, 20.0
          %v467 = vmin.f32 %v463, 20.0
          %v468 = vmul.f32 %v466, 1.442695
          %v469 = vpow.pop %v468
          %v470 = vmul.f32 %v467, 1.442695
          %v471 = vpow.pop %v470
          %v472 = vadd.f32 %v469, 1.0
          %v473 = vlog2.pop %v472
          %v474 = vmul.f32 %v473, 0.6931472
          %v475 = vmul.f32 -0.5, %v469
          %v476 = vadd.f32 %v475, 1.0
          %v477 = vmul.f32 %v476, %v469
          %v478 = vand.u32 2147483647, %v469
          %vm479 = vcmp.lt.f32.partialorder %v478, 0.0004427343
          %v480 = vsel %vm479, %v477, %v474
          %v481 = vadd.f32 %v471, 1.0
          %v482 = vlog2.pop %v481
          %v483 = vmul.f32 %v482, 0.6931472
          %v484 = vmul.f32 -0.5, %v471
          %v485 = vadd.f32 %v484, 1.0
          %v486 = vmul.f32 %v485, %v471
          %v487 = vand.u32 2147483647, %v471
          %vm488 = vcmp.lt.f32.partialorder %v487, 0.0004427343
          %v489 = vsel %vm488, %v486, %v483
          %v490 = vsel %vm464, %v462, %v480
          %v491 = vsel %vm465, %v463, %v489
          %v492 = vld [vmem:[#allocation12] sm:$0xff]
          %v493 = vld [vmem:[#allocation12 + $0x8] sm:$0xff]
          %v494 = vld [vmem:[#allocation12 + $0x10] sm:$0xff]
          %v495 = vld [vmem:[#allocation12 + $0x18] sm:$0xff]
          %v496 = vld [vmem:[#allocation12 + $0x20] sm:$0xff]
          %v497 = vld [vmem:[#allocation12 + $0x28] sm:$0xff]
          %v498 = vld [vmem:[#allocation12 + $0x30] sm:$0xff]
          %v499 = vld [vmem:[#allocation12 + $0x38] sm:$0xff]
          %v500 = vld [vmem:[#allocation12 + $0x40] sm:$0xff]
          %v501 = vld [vmem:[#allocation12 + $0x48] sm:$0xff]
          %v502 = vld [vmem:[#allocation12 + $0x50] sm:$0xff]
          %v503 = vld [vmem:[#allocation12 + $0x58] sm:$0xff]
          %v504 = vld [vmem:[#allocation12 + $0x60] sm:$0xff]
          %v505 = vld [vmem:[#allocation12 + $0x68] sm:$0xff]
          %v506 = vld [vmem:[#allocation12 + $0x70] sm:$0xff]
          %v507 = vld [vmem:[#allocation12 + $0x78] sm:$0xff]
          %v508 = vld [vmem:[#allocation12 + $0x80] sm:$0xff]
          %v509 = vld [vmem:[#allocation12 + $0x88] sm:$0xff]
          %v510 = vld [vmem:[#allocation12 + $0x90] sm:$0xff]
          %v511 = vld [vmem:[#allocation12 + $0x98] sm:$0xff]
          %v512 = vld [vmem:[#allocation12 + $0xa0] sm:$0xff]
          %v513 = vld [vmem:[#allocation12 + $0xa8] sm:$0xff]
          %v514 = vld [vmem:[#allocation12 + $0xb0] sm:$0xff]
          %v515 = vld [vmem:[#allocation12 + $0xb8] sm:$0xff]
          %v516 = vld [vmem:[#allocation12 + $0xc0] sm:$0xff]
          %v517 = vld [vmem:[#allocation12 + $0xc8] sm:$0xff]
          %v518 = vld [vmem:[#allocation12 + $0xd0] sm:$0xff]
          %v519 = vld [vmem:[#allocation12 + $0xd8] sm:$0xff]
          %v520 = vld [vmem:[#allocation12 + $0xe0] sm:$0xff]
          %v521 = vld [vmem:[#allocation12 + $0xe8] sm:$0xff]
          %v522 = vld [vmem:[#allocation12 + $0xf0] sm:$0xff]
          %v523 = vld [vmem:[#allocation12 + $0xf8] sm:$0xff]
          %v524 = vld [vmem:[#allocation12 + $0x100] sm:$0xff]
          %v525 = vld [vmem:[#allocation12 + $0x108] sm:$0xff]
          %v526 = vld [vmem:[#allocation12 + $0x110] sm:$0xff]
          %v527 = vld [vmem:[#allocation12 + $0x118] sm:$0xff]
          %v528 = vld [vmem:[#allocation12 + $0x120] sm:$0xff]
          %v529 = vld [vmem:[#allocation12 + $0x128] sm:$0xff]
          %v530 = vld [vmem:[#allocation12 + $0x130] sm:$0xff]
          %v531 = vld [vmem:[#allocation12 + $0x138] sm:$0xff]
          %v532 = vld [vmem:[#allocation12 + $0x140] sm:$0xff]
          %v533 = vld [vmem:[#allocation12 + $0x148] sm:$0xff]
          %v534 = vld [vmem:[#allocation12 + $0x150] sm:$0xff]
          %v535 = vld [vmem:[#allocation12 + $0x158] sm:$0xff]
          %v536 = vld [vmem:[#allocation12 + $0x160] sm:$0xff]
          %v537 = vld [vmem:[#allocation12 + $0x168] sm:$0xff]
          %v538 = vld [vmem:[#allocation12 + $0x170] sm:$0xff]
          %v539 = vld [vmem:[#allocation12 + $0x178] sm:$0xff]
          %v540 = vld [vmem:[#allocation12 + $0x180] sm:$0xff]
          %v541 = vld [vmem:[#allocation12 + $0x188] sm:$0xff]
          %v542 = vld [vmem:[#allocation12 + $0x190] sm:$0xff]
          %v543 = vld [vmem:[#allocation12 + $0x198] sm:$0xff]
          %v544 = vld [vmem:[#allocation12 + $0x1a0] sm:$0xff]
          %v545 = vld [vmem:[#allocation12 + $0x1a8] sm:$0xff]
          %v546 = vld [vmem:[#allocation12 + $0x1b0] sm:$0xff]
          %v547 = vld [vmem:[#allocation12 + $0x1b8] sm:$0xff]
          %v548 = vld [vmem:[#allocation12 + $0x1c0] sm:$0xff]
          %v549 = vld [vmem:[#allocation12 + $0x1c8] sm:$0xff]
          %v550 = vld [vmem:[#allocation12 + $0x1d0] sm:$0xff]
          %v551 = vld [vmem:[#allocation12 + $0x1d8] sm:$0xff]
          %v552 = vld [vmem:[#allocation12 + $0x1e0] sm:$0xff]
          %v553 = vld [vmem:[#allocation12 + $0x1e8] sm:$0xff]
          %v554 = vld [vmem:[#allocation12 + $0x1f0] sm:$0xff]
          %v555 = vld [vmem:[#allocation12 + $0x1f8] sm:$0xff]
          %v556 = vld [vmem:[%s6] sm:$0x3]
          %v558 = vperm.slane %v556, 0
          %v559 = vperm.slane %v556, 1
          %562 = vmatpush.msra.mxu0 %v522
          %563 = vmatpush.msra.mxu0 %v520
          %564 = vmatpush.msra.mxu0 %v518
          %565 = vmatpush.msra.mxu0 %v516
          %566 = vmatpush.msra.mxu0 %v514
          %567 = vmatpush.msra.mxu0 %v512
          %568 = vmatpush.msra.mxu0 %v510
          %569 = vmatpush.msra.mxu0 %v508
          %570 = vmatpush.msra.mxu0 %v506
          %571 = vmatpush.msra.mxu0 %v504
          %572 = vmatpush.msra.mxu0 %v502
          %573 = vmatpush.msra.mxu0 %v500
          %574 = vmatpush.msra.mxu0 %v498
          %575 = vmatpush.msra.mxu0 %v496
          %576 = vmatpush.msra.mxu0 %v494
          %577 = vmatpush.msra.mxu0 %v492
          %578 = vmatmul.f32.gmra.mxu0 %v490
          %v579 = vpop.f32.mrf.mxu0
          %v580 = vadd.f32 %v558, %v579
          %581 = vdwg.mxu0
          %582 = vmatpush.msra.mxu0 %v554
          %583 = vmatpush.msra.mxu0 %v552
          %584 = vmatpush.msra.mxu0 %v550
          %585 = vmatpush.msra.mxu0 %v548
          %586 = vmatpush.msra.mxu0 %v546
          %587 = vmatpush.msra.mxu0 %v544
          %588 = vmatpush.msra.mxu0 %v542
          %589 = vmatpush.msra.mxu0 %v540
          %590 = vmatpush.msra.mxu0 %v538
          %591 = vmatpush.msra.mxu0 %v536
          %592 = vmatpush.msra.mxu0 %v534
          %593 = vmatpush.msra.mxu0 %v532
          %594 = vmatpush.msra.mxu0 %v530
          %595 = vmatpush.msra.mxu0 %v528
          %596 = vmatpush.msra.mxu0 %v526
          %597 = vmatpush.msra.mxu0 %v524
          %598 = vmatmul.f32.gmra.mxu0 %v491
          %v599 = vpop.f32.mrf.mxu0
          %v600 = vadd.f32 %v580, %v599
          %601 = vdwg.mxu0
          %602 = vmatpush.msra.mxu0 %v523
          %603 = vmatpush.msra.mxu0 %v521
          %604 = vmatpush.msra.mxu0 %v519
          %605 = vmatpush.msra.mxu0 %v517
          %606 = vmatpush.msra.mxu0 %v515
          %607 = vmatpush.msra.mxu0 %v513
          %608 = vmatpush.msra.mxu0 %v511
          %609 = vmatpush.msra.mxu0 %v509
          %610 = vmatpush.msra.mxu0 %v507
          %611 = vmatpush.msra.mxu0 %v505
          %612 = vmatpush.msra.mxu0 %v503
          %613 = vmatpush.msra.mxu0 %v501
          %614 = vmatpush.msra.mxu0 %v499
          %615 = vmatpush.msra.mxu0 %v497
          %616 = vmatpush.msra.mxu0 %v495
          %617 = vmatpush.msra.mxu0 %v493
          %618 = vmatmul.f32.gmra.mxu0 %v490
          %v619 = vpop.f32.mrf.mxu0
          %v620 = vadd.f32 %v559, %v619
          %621 = vdwg.mxu0
          %622 = vmatpush.msra.mxu0 %v555
          %623 = vmatpush.msra.mxu0 %v553
          %624 = vmatpush.msra.mxu0 %v551
          %625 = vmatpush.msra.mxu0 %v549
          %626 = vmatpush.msra.mxu0 %v547
          %627 = vmatpush.msra.mxu0 %v545
          %628 = vmatpush.msra.mxu0 %v543
          %629 = vmatpush.msra.mxu0 %v541
          %630 = vmatpush.msra.mxu0 %v539
          %631 = vmatpush.msra.mxu0 %v537
          %632 = vmatpush.msra.mxu0 %v535
          %633 = vmatpush.msra.mxu0 %v533
          %634 = vmatpush.msra.mxu0 %v531
          %635 = vmatpush.msra.mxu0 %v529
          %636 = vmatpush.msra.mxu0 %v527
          %637 = vmatpush.msra.mxu0 %v525
          %638 = vmatmul.f32.gmra.mxu0 %v491
          %v639 = vpop.f32.mrf.mxu0
          %v640 = vadd.f32 %v620, %v639
          %641 = vdwg.mxu0
          %vm642 = vcmp.gt.f32.partialorder %v600, 20.0
          %vm643 = vcmp.gt.f32.partialorder %v640, 20.0
          %v644 = vmin.f32 %v600, 20.0
          %v645 = vmin.f32 %v640, 20.0
          %v646 = vmul.f32 %v644, 1.442695
          %v647 = vpow.pop %v646
          %v648 = vmul.f32 %v645, 1.442695
          %v649 = vpow.pop %v648
          %v650 = vadd.f32 %v647, 1.0
          %v651 = vlog2.pop %v650
          %v652 = vmul.f32 %v651, 0.6931472
          %v653 = vmul.f32 -0.5, %v647
          %v654 = vadd.f32 %v653, 1.0
          %v655 = vmul.f32 %v654, %v647
          %v656 = vand.u32 2147483647, %v647
          %vm657 = vcmp.lt.f32.partialorder %v656, 0.0004427343
          %v658 = vsel %vm657, %v655, %v652
          %v659 = vadd.f32 %v649, 1.0
          %v660 = vlog2.pop %v659
          %v661 = vmul.f32 %v660, 0.6931472
          %v662 = vmul.f32 -0.5, %v649
          %v663 = vadd.f32 %v662, 1.0
          %v664 = vmul.f32 %v663, %v649
          %v665 = vand.u32 2147483647, %v649
          %vm666 = vcmp.lt.f32.partialorder %v665, 0.0004427343
          %v667 = vsel %vm666, %v664, %v661
          %v668 = vsel %vm642, %v600, %v658
          %v669 = vsel %vm643, %v640, %v667
          %v670 = vld [vmem:[#allocation13] sm:$0xff]
          %v671 = vld [vmem:[#allocation13 + $0x8] sm:$0xff]
          %v672 = vld [vmem:[#allocation13 + $0x10] sm:$0xff]
          %v673 = vld [vmem:[#allocation13 + $0x18] sm:$0xff]
          %v674 = vld [vmem:[#allocation13 + $0x20] sm:$0xff]
          %v675 = vld [vmem:[#allocation13 + $0x28] sm:$0xff]
          %v676 = vld [vmem:[#allocation13 + $0x30] sm:$0xff]
          %v677 = vld [vmem:[#allocation13 + $0x38] sm:$0xff]
          %v678 = vld [vmem:[#allocation13 + $0x40] sm:$0xff]
          %v679 = vld [vmem:[#allocation13 + $0x48] sm:$0xff]
          %v680 = vld [vmem:[#allocation13 + $0x50] sm:$0xff]
          %v681 = vld [vmem:[#allocation13 + $0x58] sm:$0xff]
          %v682 = vld [vmem:[#allocation13 + $0x60] sm:$0xff]
          %v683 = vld [vmem:[#allocation13 + $0x68] sm:$0xff]
          %v684 = vld [vmem:[#allocation13 + $0x70] sm:$0xff]
          %v685 = vld [vmem:[#allocation13 + $0x78] sm:$0xff]
          %v686 = vld [vmem:[#allocation13 + $0x80] sm:$0xff]
          %v687 = vld [vmem:[#allocation13 + $0x88] sm:$0xff]
          %v688 = vld [vmem:[#allocation13 + $0x90] sm:$0xff]
          %v689 = vld [vmem:[#allocation13 + $0x98] sm:$0xff]
          %v690 = vld [vmem:[#allocation13 + $0xa0] sm:$0xff]
          %v691 = vld [vmem:[#allocation13 + $0xa8] sm:$0xff]
          %v692 = vld [vmem:[#allocation13 + $0xb0] sm:$0xff]
          %v693 = vld [vmem:[#allocation13 + $0xb8] sm:$0xff]
          %v694 = vld [vmem:[#allocation13 + $0xc0] sm:$0xff]
          %v695 = vld [vmem:[#allocation13 + $0xc8] sm:$0xff]
          %v696 = vld [vmem:[#allocation13 + $0xd0] sm:$0xff]
          %v697 = vld [vmem:[#allocation13 + $0xd8] sm:$0xff]
          %v698 = vld [vmem:[#allocation13 + $0xe0] sm:$0xff]
          %v699 = vld [vmem:[#allocation13 + $0xe8] sm:$0xff]
          %v700 = vld [vmem:[#allocation13 + $0xf0] sm:$0xff]
          %v701 = vld [vmem:[#allocation13 + $0xf8] sm:$0xff]
          %v702 = vld [vmem:[%s8] sm:$0x1]
          %v704 = vperm.slane %v702, 0
          %706 = vmatpush.msra.mxu0 %v685
          %707 = vmatpush.msra.mxu0 %v684
          %708 = vmatpush.msra.mxu0 %v683
          %709 = vmatpush.msra.mxu0 %v682
          %710 = vmatpush.msra.mxu0 %v681
          %711 = vmatpush.msra.mxu0 %v680
          %712 = vmatpush.msra.mxu0 %v679
          %713 = vmatpush.msra.mxu0 %v678
          %714 = vmatpush.msra.mxu0 %v677
          %715 = vmatpush.msra.mxu0 %v676
          %716 = vmatpush.msra.mxu0 %v675
          %717 = vmatpush.msra.mxu0 %v674
          %718 = vmatpush.msra.mxu0 %v673
          %719 = vmatpush.msra.mxu0 %v672
          %720 = vmatpush.msra.mxu0 %v671
          %721 = vmatpush.msra.mxu0 %v670
          %722 = vmatmul.f32.gmra.mxu0 %v668
          %v723 = vpop.f32.mrf.mxu0
          %v724 = vadd.f32 %v704, %v723
          %725 = vdwg.mxu0
          %726 = vmatpush.msra.mxu0 %v701
          %727 = vmatpush.msra.mxu0 %v700
          %728 = vmatpush.msra.mxu0 %v699
          %729 = vmatpush.msra.mxu0 %v698
          %730 = vmatpush.msra.mxu0 %v697
          %731 = vmatpush.msra.mxu0 %v696
          %732 = vmatpush.msra.mxu0 %v695
          %733 = vmatpush.msra.mxu0 %v694
          %734 = vmatpush.msra.mxu0 %v693
          %735 = vmatpush.msra.mxu0 %v692
          %736 = vmatpush.msra.mxu0 %v691
          %737 = vmatpush.msra.mxu0 %v690
          %738 = vmatpush.msra.mxu0 %v689
          %739 = vmatpush.msra.mxu0 %v688
          %740 = vmatpush.msra.mxu0 %v687
          %741 = vmatpush.msra.mxu0 %v686
          %742 = vmatmul.f32.gmra.mxu0 %v669
          %v743 = vpop.f32.mrf.mxu0
          %v744 = vadd.f32 %v724, %v743
          %745 = vdwg.mxu0
          %s746 = smul.f32 %s426, 0.5
          %v747 = vstv %s746
          %v748 = vmul.f32 %v747, %v744
          %v749 = vadd.f32 %v427, %v748
          %751 = vset.pattern.permute.xlu0 0
          %752 = vperm.xlu0 %751, %v749
          %v753 = vpop.permute.xlu0 %752
          %v755 = vmul.f32 %v753, %v436
          %v756 = vmul.f32 %v753, %v437
          %v757 = vadd.f32 %v443, %v755
          %v758 = vadd.f32 %v444, %v756
          %759 = vset.pattern.permute.xlu0 1
          %760 = vperm.xlu0 %759, %v749
          %v761 = vpop.permute.xlu0 %760
          %v763 = vmul.f32 %v761, %v456
          %v764 = vmul.f32 %v761, %v457
          %v765 = vadd.f32 %v757, %v763
          %v766 = vadd.f32 %v758, %v764
          %vm767 = vcmp.gt.f32.partialorder %v765, 20.0
          %vm768 = vcmp.gt.f32.partialorder %v766, 20.0
          %v769 = vmin.f32 %v765, 20.0
          %v770 = vmin.f32 %v766, 20.0
          %v771 = vmul.f32 %v769, 1.442695
          %v772 = vpow.pop %v771
          %v773 = vmul.f32 %v770, 1.442695
          %v774 = vpow.pop %v773
          %v775 = vadd.f32 %v772, 1.0
          %v776 = vlog2.pop %v775
          %v777 = vmul.f32 %v776, 0.6931472
          %v778 = vmul.f32 -0.5, %v772
          %v779 = vadd.f32 %v778, 1.0
          %v780 = vmul.f32 %v779, %v772
          %v781 = vand.u32 2147483647, %v772
          %vm782 = vcmp.lt.f32.partialorder %v781, 0.0004427343
          %v783 = vsel %vm782, %v780, %v777
          %v784 = vadd.f32 %v774, 1.0
          %v785 = vlog2.pop %v784
          %v786 = vmul.f32 %v785, 0.6931472
          %v787 = vmul.f32 -0.5, %v774
          %v788 = vadd.f32 %v787, 1.0
          %v789 = vmul.f32 %v788, %v774
          %v790 = vand.u32 2147483647, %v774
          %vm791 = vcmp.lt.f32.partialorder %v790, 0.0004427343
          %v792 = vsel %vm791, %v789, %v786
          %v793 = vsel %vm767, %v765, %v783
          %v794 = vsel %vm768, %v766, %v792
          %795 = vmatpush.msra.mxu0 %v522
          %796 = vmatpush.msra.mxu0 %v520
          %797 = vmatpush.msra.mxu0 %v518
          %798 = vmatpush.msra.mxu0 %v516
          %799 = vmatpush.msra.mxu0 %v514
          %800 = vmatpush.msra.mxu0 %v512
          %801 = vmatpush.msra.mxu0 %v510
          %802 = vmatpush.msra.mxu0 %v508
          %803 = vmatpush.msra.mxu0 %v506
          %804 = vmatpush.msra.mxu0 %v504
          %805 = vmatpush.msra.mxu0 %v502
          %806 = vmatpush.msra.mxu0 %v500
          %807 = vmatpush.msra.mxu0 %v498
          %808 = vmatpush.msra.mxu0 %v496
          %809 = vmatpush.msra.mxu0 %v494
          %810 = vmatpush.msra.mxu0 %v492
          %811 = vmatmul.f32.gmra.mxu0 %v793
          %v812 = vpop.f32.mrf.mxu0
          %v813 = vadd.f32 %v558, %v812
          %814 = vdwg.mxu0
          %815 = vmatpush.msra.mxu0 %v554
          %816 = vmatpush.msra.mxu0 %v552
          %817 = vmatpush.msra.mxu0 %v550
          %818 = vmatpush.msra.mxu0 %v548
          %819 = vmatpush.msra.mxu0 %v546
          %820 = vmatpush.msra.mxu0 %v544
          %821 = vmatpush.msra.mxu0 %v542
          %822 = vmatpush.msra.mxu0 %v540
          %823 = vmatpush.msra.mxu0 %v538
          %824 = vmatpush.msra.mxu0 %v536
          %825 = vmatpush.msra.mxu0 %v534
          %826 = vmatpush.msra.mxu0 %v532
          %827 = vmatpush.msra.mxu0 %v530
          %828 = vmatpush.msra.mxu0 %v528
          %829 = vmatpush.msra.mxu0 %v526
          %830 = vmatpush.msra.mxu0 %v524
          %831 = vmatmul.f32.gmra.mxu0 %v794
          %v832 = vpop.f32.mrf.mxu0
          %v833 = vadd.f32 %v813, %v832
          %834 = vdwg.mxu0
          %835 = vmatpush.msra.mxu0 %v523
          %836 = vmatpush.msra.mxu0 %v521
          %837 = vmatpush.msra.mxu0 %v519
          %838 = vmatpush.msra.mxu0 %v517
          %839 = vmatpush.msra.mxu0 %v515
          %840 = vmatpush.msra.mxu0 %v513
          %841 = vmatpush.msra.mxu0 %v511
          %842 = vmatpush.msra.mxu0 %v509
          %843 = vmatpush.msra.mxu0 %v507
          %844 = vmatpush.msra.mxu0 %v505
          %845 = vmatpush.msra.mxu0 %v503
          %846 = vmatpush.msra.mxu0 %v501
          %847 = vmatpush.msra.mxu0 %v499
          %848 = vmatpush.msra.mxu0 %v497
          %849 = vmatpush.msra.mxu0 %v495
          %850 = vmatpush.msra.mxu0 %v493
          %851 = vmatmul.f32.gmra.mxu0 %v793
          %v852 = vpop.f32.mrf.mxu0
          %v853 = vadd.f32 %v559, %v852
          %854 = vdwg.mxu0
          %855 = vmatpush.msra.mxu0 %v555
          %856 = vmatpush.msra.mxu0 %v553
          %857 = vmatpush.msra.mxu0 %v551
          %858 = vmatpush.msra.mxu0 %v549
          %859 = vmatpush.msra.mxu0 %v547
          %860 = vmatpush.msra.mxu0 %v545
          %861 = vmatpush.msra.mxu0 %v543
          %862 = vmatpush.msra.mxu0 %v541
          %863 = vmatpush.msra.mxu0 %v539
          %864 = vmatpush.msra.mxu0 %v537
          %865 = vmatpush.msra.mxu0 %v535
          %866 = vmatpush.msra.mxu0 %v533
          %867 = vmatpush.msra.mxu0 %v531
          %868 = vmatpush.msra.mxu0 %v529
          %869 = vmatpush.msra.mxu0 %v527
          %870 = vmatpush.msra.mxu0 %v525
          %871 = vmatmul.f32.gmra.mxu0 %v794
          %v872 = vpop.f32.mrf.mxu0
          %v873 = vadd.f32 %v853, %v872
          %874 = vdwg.mxu0
          %vm875 = vcmp.gt.f32.partialorder %v833, 20.0
          %vm876 = vcmp.gt.f32.partialorder %v873, 20.0
          %v877 = vmin.f32 %v833, 20.0
          %v878 = vmin.f32 %v873, 20.0
          %v879 = vmul.f32 %v877, 1.442695
          %v880 = vpow.pop %v879
          %v881 = vmul.f32 %v878, 1.442695
          %v882 = vpow.pop %v881
          %v883 = vadd.f32 %v880, 1.0
          %v884 = vlog2.pop %v883
          %v885 = vmul.f32 %v884, 0.6931472
          %v886 = vmul.f32 -0.5, %v880
          %v887 = vadd.f32 %v886, 1.0
          %v888 = vmul.f32 %v887, %v880
          %v889 = vand.u32 2147483647, %v880
          %vm890 = vcmp.lt.f32.partialorder %v889, 0.0004427343
          %v891 = vsel %vm890, %v888, %v885
          %v892 = vadd.f32 %v882, 1.0
          %v893 = vlog2.pop %v892
          %v894 = vmul.f32 %v893, 0.6931472
          %v895 = vmul.f32 -0.5, %v882
          %v896 = vadd.f32 %v895, 1.0
          %v897 = vmul.f32 %v896, %v882
          %v898 = vand.u32 2147483647, %v882
          %vm899 = vcmp.lt.f32.partialorder %v898, 0.0004427343
          %v900 = vsel %vm899, %v897, %v894
          %v901 = vsel %vm875, %v833, %v891
          %v902 = vsel %vm876, %v873, %v900
          %903 = vmatpush.msra.mxu0 %v685
          %904 = vmatpush.msra.mxu0 %v684
          %905 = vmatpush.msra.mxu0 %v683
          %906 = vmatpush.msra.mxu0 %v682
          %907 = vmatpush.msra.mxu0 %v681
          %908 = vmatpush.msra.mxu0 %v680
          %909 = vmatpush.msra.mxu0 %v679
          %910 = vmatpush.msra.mxu0 %v678
          %911 = vmatpush.msra.mxu0 %v677
          %912 = vmatpush.msra.mxu0 %v676
          %913 = vmatpush.msra.mxu0 %v675
          %914 = vmatpush.msra.mxu0 %v674
          %915 = vmatpush.msra.mxu0 %v673
          %916 = vmatpush.msra.mxu0 %v672
          %917 = vmatpush.msra.mxu0 %v671
          %918 = vmatpush.msra.mxu0 %v670
          %919 = vmatmul.f32.gmra.mxu0 %v901
          %v920 = vpop.f32.mrf.mxu0
          %v921 = vadd.f32 %v704, %v920
          %922 = vdwg.mxu0
          %923 = vmatpush.msra.mxu0 %v701
          %924 = vmatpush.msra.mxu0 %v700
          %925 = vmatpush.msra.mxu0 %v699
          %926 = vmatpush.msra.mxu0 %v698
          %927 = vmatpush.msra.mxu0 %v697
          %928 = vmatpush.msra.mxu0 %v696
          %929 = vmatpush.msra.mxu0 %v695
          %930 = vmatpush.msra.mxu0 %v694
          %931 = vmatpush.msra.mxu0 %v693
          %932 = vmatpush.msra.mxu0 %v692
          %933 = vmatpush.msra.mxu0 %v691
          %934 = vmatpush.msra.mxu0 %v690
          %935 = vmatpush.msra.mxu0 %v689
          %936 = vmatpush.msra.mxu0 %v688
          %937 = vmatpush.msra.mxu0 %v687
          %938 = vmatpush.msra.mxu0 %v686
          %939 = vmatmul.f32.gmra.mxu0 %v902
          %v940 = vpop.f32.mrf.mxu0
          %v941 = vadd.f32 %v921, %v940
          %942 = vdwg.mxu0
          %v943 = vmul.f32 %v747, %v941
          %v944 = vadd.f32 %v427, %v943
          %946 = vset.pattern.permute.xlu0 0
          %947 = vperm.xlu0 %946, %v944
          %v948 = vpop.permute.xlu0 %947
          %v950 = vmul.f32 %v948, %v436
          %v951 = vmul.f32 %v948, %v437
          %v952 = vadd.f32 %v443, %v950
          %v953 = vadd.f32 %v444, %v951
          %954 = vset.pattern.permute.xlu0 1
          %955 = vperm.xlu0 %954, %v944
          %v956 = vpop.permute.xlu0 %955
          %v958 = vmul.f32 %v956, %v456
          %v959 = vmul.f32 %v956, %v457
          %v960 = vadd.f32 %v952, %v958
          %v961 = vadd.f32 %v953, %v959
          %vm962 = vcmp.gt.f32.partialorder %v960, 20.0
          %vm963 = vcmp.gt.f32.partialorder %v961, 20.0
          %v964 = vmin.f32 %v960, 20.0
          %v965 = vmin.f32 %v961, 20.0
          %v966 = vmul.f32 %v964, 1.442695
          %v967 = vpow.pop %v966
          %v968 = vmul.f32 %v965, 1.442695
          %v969 = vpow.pop %v968
          %v970 = vadd.f32 %v967, 1.0
          %v971 = vlog2.pop %v970
          %v972 = vmul.f32 %v971, 0.6931472
          %v973 = vmul.f32 -0.5, %v967
          %v974 = vadd.f32 %v973, 1.0
          %v975 = vmul.f32 %v974, %v967
          %v976 = vand.u32 2147483647, %v967
          %vm977 = vcmp.lt.f32.partialorder %v976, 0.0004427343
          %v978 = vsel %vm977, %v975, %v972
          %v979 = vadd.f32 %v969, 1.0
          %v980 = vlog2.pop %v979
          %v981 = vmul.f32 %v980, 0.6931472
          %v982 = vmul.f32 -0.5, %v969
          %v983 = vadd.f32 %v982, 1.0
          %v984 = vmul.f32 %v983, %v969
          %v985 = vand.u32 2147483647, %v969
          %vm986 = vcmp.lt.f32.partialorder %v985, 0.0004427343
          %v987 = vsel %vm986, %v984, %v981
          %v988 = vsel %vm962, %v960, %v978
          %v989 = vsel %vm963, %v961, %v987
          %990 = vmatpush.msra.mxu0 %v522
          %991 = vmatpush.msra.mxu0 %v520
          %992 = vmatpush.msra.mxu0 %v518
          %993 = vmatpush.msra.mxu0 %v516
          %994 = vmatpush.msra.mxu0 %v514
          %995 = vmatpush.msra.mxu0 %v512
          %996 = vmatpush.msra.mxu0 %v510
          %997 = vmatpush.msra.mxu0 %v508
          %998 = vmatpush.msra.mxu0 %v506
          %999 = vmatpush.msra.mxu0 %v504
          %1000 = vmatpush.msra.mxu0 %v502
          %1001 = vmatpush.msra.mxu0 %v500
          %1002 = vmatpush.msra.mxu0 %v498
          %1003 = vmatpush.msra.mxu0 %v496
          %1004 = vmatpush.msra.mxu0 %v494
          %1005 = vmatpush.msra.mxu0 %v492
          %1006 = vmatmul.f32.gmra.mxu0 %v988
          %v1007 = vpop.f32.mrf.mxu0
          %v1008 = vadd.f32 %v558, %v1007
          %1009 = vdwg.mxu0
          %1010 = vmatpush.msra.mxu0 %v554
          %1011 = vmatpush.msra.mxu0 %v552
          %1012 = vmatpush.msra.mxu0 %v550
          %1013 = vmatpush.msra.mxu0 %v548
          %1014 = vmatpush.msra.mxu0 %v546
          %1015 = vmatpush.msra.mxu0 %v544
          %1016 = vmatpush.msra.mxu0 %v542
          %1017 = vmatpush.msra.mxu0 %v540
          %1018 = vmatpush.msra.mxu0 %v538
          %1019 = vmatpush.msra.mxu0 %v536
          %1020 = vmatpush.msra.mxu0 %v534
          %1021 = vmatpush.msra.mxu0 %v532
          %1022 = vmatpush.msra.mxu0 %v530
          %1023 = vmatpush.msra.mxu0 %v528
          %1024 = vmatpush.msra.mxu0 %v526
          %1025 = vmatpush.msra.mxu0 %v524
          %1026 = vmatmul.f32.gmra.mxu0 %v989
          %v1027 = vpop.f32.mrf.mxu0
          %v1028 = vadd.f32 %v1008, %v1027
          %1029 = vdwg.mxu0
          %1030 = vmatpush.msra.mxu0 %v523
          %1031 = vmatpush.msra.mxu0 %v521
          %1032 = vmatpush.msra.mxu0 %v519
          %1033 = vmatpush.msra.mxu0 %v517
          %1034 = vmatpush.msra.mxu0 %v515
          %1035 = vmatpush.msra.mxu0 %v513
          %1036 = vmatpush.msra.mxu0 %v511
          %1037 = vmatpush.msra.mxu0 %v509
          %1038 = vmatpush.msra.mxu0 %v507
          %1039 = vmatpush.msra.mxu0 %v505
          %1040 = vmatpush.msra.mxu0 %v503
          %1041 = vmatpush.msra.mxu0 %v501
          %1042 = vmatpush.msra.mxu0 %v499
          %1043 = vmatpush.msra.mxu0 %v497
          %1044 = vmatpush.msra.mxu0 %v495
          %1045 = vmatpush.msra.mxu0 %v493
          %1046 = vmatmul.f32.gmra.mxu0 %v988
          %v1047 = vpop.f32.mrf.mxu0
          %v1048 = vadd.f32 %v559, %v1047
          %1049 = vdwg.mxu0
          %1050 = vmatpush.msra.mxu0 %v555
          %1051 = vmatpush.msra.mxu0 %v553
          %1052 = vmatpush.msra.mxu0 %v551
          %1053 = vmatpush.msra.mxu0 %v549
          %1054 = vmatpush.msra.mxu0 %v547
          %1055 = vmatpush.msra.mxu0 %v545
          %1056 = vmatpush.msra.mxu0 %v543
          %1057 = vmatpush.msra.mxu0 %v541
          %1058 = vmatpush.msra.mxu0 %v539
          %1059 = vmatpush.msra.mxu0 %v537
          %1060 = vmatpush.msra.mxu0 %v535
          %1061 = vmatpush.msra.mxu0 %v533
          %1062 = vmatpush.msra.mxu0 %v531
          %1063 = vmatpush.msra.mxu0 %v529
          %1064 = vmatpush.msra.mxu0 %v527
          %1065 = vmatpush.msra.mxu0 %v525
          %1066 = vmatmul.f32.gmra.mxu0 %v989
          %v1067 = vpop.f32.mrf.mxu0
          %v1068 = vadd.f32 %v1048, %v1067
          %1069 = vdwg.mxu0
          %vm1070 = vcmp.gt.f32.partialorder %v1028, 20.0
          %vm1071 = vcmp.gt.f32.partialorder %v1068, 20.0
          %v1072 = vmin.f32 %v1028, 20.0
          %v1073 = vmin.f32 %v1068, 20.0
          %v1074 = vmul.f32 %v1072, 1.442695
          %v1075 = vpow.pop %v1074
          %v1076 = vmul.f32 %v1073, 1.442695
          %v1077 = vpow.pop %v1076
          %v1078 = vadd.f32 %v1075, 1.0
          %v1079 = vlog2.pop %v1078
          %v1080 = vmul.f32 %v1079, 0.6931472
          %v1081 = vmul.f32 -0.5, %v1075
          %v1082 = vadd.f32 %v1081, 1.0
          %v1083 = vmul.f32 %v1082, %v1075
          %v1084 = vand.u32 2147483647, %v1075
          %vm1085 = vcmp.lt.f32.partialorder %v1084, 0.0004427343
          %v1086 = vsel %vm1085, %v1083, %v1080
          %v1087 = vadd.f32 %v1077, 1.0
          %v1088 = vlog2.pop %v1087
          %v1089 = vmul.f32 %v1088, 0.6931472
          %v1090 = vmul.f32 -0.5, %v1077
          %v1091 = vadd.f32 %v1090, 1.0
          %v1092 = vmul.f32 %v1091, %v1077
          %v1093 = vand.u32 2147483647, %v1077
          %vm1094 = vcmp.lt.f32.partialorder %v1093, 0.0004427343
          %v1095 = vsel %vm1094, %v1092, %v1089
          %v1096 = vsel %vm1070, %v1028, %v1086
          %v1097 = vsel %vm1071, %v1068, %v1095
          %1098 = vmatpush.msra.mxu0 %v685
          %1099 = vmatpush.msra.mxu0 %v684
          %1100 = vmatpush.msra.mxu0 %v683
          %1101 = vmatpush.msra.mxu0 %v682
          %1102 = vmatpush.msra.mxu0 %v681
          %1103 = vmatpush.msra.mxu0 %v680
          %1104 = vmatpush.msra.mxu0 %v679
          %1105 = vmatpush.msra.mxu0 %v678
          %1106 = vmatpush.msra.mxu0 %v677
          %1107 = vmatpush.msra.mxu0 %v676
          %1108 = vmatpush.msra.mxu0 %v675
          %1109 = vmatpush.msra.mxu0 %v674
          %1110 = vmatpush.msra.mxu0 %v673
          %1111 = vmatpush.msra.mxu0 %v672
          %1112 = vmatpush.msra.mxu0 %v671
          %1113 = vmatpush.msra.mxu0 %v670
          %1114 = vmatmul.f32.gmra.mxu0 %v1096
          %v1115 = vpop.f32.mrf.mxu0
          %v1116 = vadd.f32 %v704, %v1115
          %1117 = vdwg.mxu0
          %1118 = vmatpush.msra.mxu0 %v701
          %1119 = vmatpush.msra.mxu0 %v700
          %1120 = vmatpush.msra.mxu0 %v699
          %1121 = vmatpush.msra.mxu0 %v698
          %1122 = vmatpush.msra.mxu0 %v697
          %1123 = vmatpush.msra.mxu0 %v696
          %1124 = vmatpush.msra.mxu0 %v695
          %1125 = vmatpush.msra.mxu0 %v694
          %1126 = vmatpush.msra.mxu0 %v693
          %1127 = vmatpush.msra.mxu0 %v692
          %1128 = vmatpush.msra.mxu0 %v691
          %1129 = vmatpush.msra.mxu0 %v690
          %1130 = vmatpush.msra.mxu0 %v689
          %1131 = vmatpush.msra.mxu0 %v688
          %1132 = vmatpush.msra.mxu0 %v687
          %1133 = vmatpush.msra.mxu0 %v686
          %1134 = vmatmul.f32.gmra.mxu0 %v1097
          %v1135 = vpop.f32.mrf.mxu0
          %v1136 = vadd.f32 %v1116, %v1135
          %1137 = vdwg.mxu0
          %v1138 = vstv %s426
          %v1139 = vmul.f32 %v1138, %v1136
          %v1140 = vadd.f32 %v427, %v1139
          %1142 = vset.pattern.permute.xlu0 0
          %1143 = vperm.xlu0 %1142, %v1140
          %v1144 = vpop.permute.xlu0 %1143
          %v1146 = vmul.f32 %v1144, %v436
          %v1147 = vmul.f32 %v1144, %v437
          %v1148 = vadd.f32 %v443, %v1146
          %v1149 = vadd.f32 %v444, %v1147
          %1150 = vset.pattern.permute.xlu0 1
          %1151 = vperm.xlu0 %1150, %v1140
          %v1152 = vpop.permute.xlu0 %1151
          %v1154 = vmul.f32 %v1152, %v456
          %v1155 = vmul.f32 %v1152, %v457
          %v1156 = vadd.f32 %v1148, %v1154
          %v1157 = vadd.f32 %v1149, %v1155
          %vm1158 = vcmp.gt.f32.partialorder %v1156, 20.0
          %vm1159 = vcmp.gt.f32.partialorder %v1157, 20.0
          %v1160 = vmin.f32 %v1156, 20.0
          %v1161 = vmin.f32 %v1157, 20.0
          %v1162 = vmul.f32 %v1160, 1.442695
          %v1163 = vpow.pop %v1162
          %v1164 = vmul.f32 %v1161, 1.442695
          %v1165 = vpow.pop %v1164
          %v1166 = vadd.f32 %v1163, 1.0
          %v1167 = vlog2.pop %v1166
          %v1168 = vmul.f32 %v1167, 0.6931472
          %v1169 = vmul.f32 -0.5, %v1163
          %v1170 = vadd.f32 %v1169, 1.0
          %v1171 = vmul.f32 %v1170, %v1163
          %v1172 = vand.u32 2147483647, %v1163
          %vm1173 = vcmp.lt.f32.partialorder %v1172, 0.0004427343
          %v1174 = vsel %vm1173, %v1171, %v1168
          %v1175 = vadd.f32 %v1165, 1.0
          %v1176 = vlog2.pop %v1175
          %v1177 = vmul.f32 %v1176, 0.6931472
          %v1178 = vmul.f32 -0.5, %v1165
          %v1179 = vadd.f32 %v1178, 1.0
          %v1180 = vmul.f32 %v1179, %v1165
          %v1181 = vand.u32 2147483647, %v1165
          %vm1182 = vcmp.lt.f32.partialorder %v1181, 0.0004427343
          %v1183 = vsel %vm1182, %v1180, %v1177
          %v1184 = vsel %vm1158, %v1156, %v1174
          %v1185 = vsel %vm1159, %v1157, %v1183
          %1186 = vmatpush.msra.mxu0 %v522
          %1187 = vmatpush.msra.mxu0 %v520
          %1188 = vmatpush.msra.mxu0 %v518
          %1189 = vmatpush.msra.mxu0 %v516
          %1190 = vmatpush.msra.mxu0 %v514
          %1191 = vmatpush.msra.mxu0 %v512
          %1192 = vmatpush.msra.mxu0 %v510
          %1193 = vmatpush.msra.mxu0 %v508
          %1194 = vmatpush.msra.mxu0 %v506
          %1195 = vmatpush.msra.mxu0 %v504
          %1196 = vmatpush.msra.mxu0 %v502
          %1197 = vmatpush.msra.mxu0 %v500
          %1198 = vmatpush.msra.mxu0 %v498
          %1199 = vmatpush.msra.mxu0 %v496
          %1200 = vmatpush.msra.mxu0 %v494
          %1201 = vmatpush.msra.mxu0 %v492
          %1202 = vmatmul.f32.gmra.mxu0 %v1184
          %v1203 = vpop.f32.mrf.mxu0
          %v1204 = vadd.f32 %v558, %v1203
          %1205 = vdwg.mxu0
          %1206 = vmatpush.msra.mxu0 %v554
          %1207 = vmatpush.msra.mxu0 %v552
          %1208 = vmatpush.msra.mxu0 %v550
          %1209 = vmatpush.msra.mxu0 %v548
          %1210 = vmatpush.msra.mxu0 %v546
          %1211 = vmatpush.msra.mxu0 %v544
          %1212 = vmatpush.msra.mxu0 %v542
          %1213 = vmatpush.msra.mxu0 %v540
          %1214 = vmatpush.msra.mxu0 %v538
          %1215 = vmatpush.msra.mxu0 %v536
          %1216 = vmatpush.msra.mxu0 %v534
          %1217 = vmatpush.msra.mxu0 %v532
          %1218 = vmatpush.msra.mxu0 %v530
          %1219 = vmatpush.msra.mxu0 %v528
          %1220 = vmatpush.msra.mxu0 %v526
          %1221 = vmatpush.msra.mxu0 %v524
          %1222 = vmatmul.f32.gmra.mxu0 %v1185
          %v1223 = vpop.f32.mrf.mxu0
          %v1224 = vadd.f32 %v1204, %v1223
          %1225 = vdwg.mxu0
          %1226 = vmatpush.msra.mxu0 %v523
          %1227 = vmatpush.msra.mxu0 %v521
          %1228 = vmatpush.msra.mxu0 %v519
          %1229 = vmatpush.msra.mxu0 %v517
          %1230 = vmatpush.msra.mxu0 %v515
          %1231 = vmatpush.msra.mxu0 %v513
          %1232 = vmatpush.msra.mxu0 %v511
          %1233 = vmatpush.msra.mxu0 %v509
          %1234 = vmatpush.msra.mxu0 %v507
          %1235 = vmatpush.msra.mxu0 %v505
          %1236 = vmatpush.msra.mxu0 %v503
          %1237 = vmatpush.msra.mxu0 %v501
          %1238 = vmatpush.msra.mxu0 %v499
          %1239 = vmatpush.msra.mxu0 %v497
          %1240 = vmatpush.msra.mxu0 %v495
          %1241 = vmatpush.msra.mxu0 %v493
          %1242 = vmatmul.f32.gmra.mxu0 %v1184
          %v1243 = vpop.f32.mrf.mxu0
          %v1244 = vadd.f32 %v559, %v1243
          %1245 = vdwg.mxu0
          %1246 = vmatpush.msra.mxu0 %v555
          %1247 = vmatpush.msra.mxu0 %v553
          %1248 = vmatpush.msra.mxu0 %v551
          %1249 = vmatpush.msra.mxu0 %v549
          %1250 = vmatpush.msra.mxu0 %v547
          %1251 = vmatpush.msra.mxu0 %v545
          %1252 = vmatpush.msra.mxu0 %v543
          %1253 = vmatpush.msra.mxu0 %v541
          %1254 = vmatpush.msra.mxu0 %v539
          %1255 = vmatpush.msra.mxu0 %v537
          %1256 = vmatpush.msra.mxu0 %v535
          %1257 = vmatpush.msra.mxu0 %v533
          %1258 = vmatpush.msra.mxu0 %v531
          %1259 = vmatpush.msra.mxu0 %v529
          %1260 = vmatpush.msra.mxu0 %v527
          %1261 = vmatpush.msra.mxu0 %v525
          %1262 = vmatmul.f32.gmra.mxu0 %v1185
          %v1263 = vpop.f32.mrf.mxu0
          %v1264 = vadd.f32 %v1244, %v1263
          %1265 = vdwg.mxu0
          %vm1266 = vcmp.gt.f32.partialorder %v1224, 20.0
          %vm1267 = vcmp.gt.f32.partialorder %v1264, 20.0
          %v1268 = vmin.f32 %v1224, 20.0
          %v1269 = vmin.f32 %v1264, 20.0
          %v1270 = vmul.f32 %v1268, 1.442695
          %v1271 = vpow.pop %v1270
          %v1272 = vmul.f32 %v1269, 1.442695
          %v1273 = vpow.pop %v1272
          %v1274 = vadd.f32 %v1271, 1.0
          %v1275 = vlog2.pop %v1274
          %v1276 = vmul.f32 %v1275, 0.6931472
          %v1277 = vmul.f32 -0.5, %v1271
          %v1278 = vadd.f32 %v1277, 1.0
          %v1279 = vmul.f32 %v1278, %v1271
          %v1280 = vand.u32 2147483647, %v1271
          %vm1281 = vcmp.lt.f32.partialorder %v1280, 0.0004427343
          %v1282 = vsel %vm1281, %v1279, %v1276
          %v1283 = vadd.f32 %v1273, 1.0
          %v1284 = vlog2.pop %v1283
          %v1285 = vmul.f32 %v1284, 0.6931472
          %v1286 = vmul.f32 -0.5, %v1273
          %v1287 = vadd.f32 %v1286, 1.0
          %v1288 = vmul.f32 %v1287, %v1273
          %v1289 = vand.u32 2147483647, %v1273
          %vm1290 = vcmp.lt.f32.partialorder %v1289, 0.0004427343
          %v1291 = vsel %vm1290, %v1288, %v1285
          %v1292 = vsel %vm1266, %v1224, %v1282
          %v1293 = vsel %vm1267, %v1264, %v1291
          %1294 = vmatpush.msra.mxu0 %v685
          %1295 = vmatpush.msra.mxu0 %v684
          %1296 = vmatpush.msra.mxu0 %v683
          %1297 = vmatpush.msra.mxu0 %v682
          %1298 = vmatpush.msra.mxu0 %v681
          %1299 = vmatpush.msra.mxu0 %v680
          %1300 = vmatpush.msra.mxu0 %v679
          %1301 = vmatpush.msra.mxu0 %v678
          %1302 = vmatpush.msra.mxu0 %v677
          %1303 = vmatpush.msra.mxu0 %v676
          %1304 = vmatpush.msra.mxu0 %v675
          %1305 = vmatpush.msra.mxu0 %v674
          %1306 = vmatpush.msra.mxu0 %v673
          %1307 = vmatpush.msra.mxu0 %v672
          %1308 = vmatpush.msra.mxu0 %v671
          %1309 = vmatpush.msra.mxu0 %v670
          %1310 = vmatmul.f32.gmra.mxu0 %v1292
          %v1311 = vpop.f32.mrf.mxu0
          %v1312 = vadd.f32 %v704, %v1311
          %1313 = vdwg.mxu0
          %1314 = vmatpush.msra.mxu0 %v701
          %1315 = vmatpush.msra.mxu0 %v700
          %1316 = vmatpush.msra.mxu0 %v699
          %1317 = vmatpush.msra.mxu0 %v698
          %1318 = vmatpush.msra.mxu0 %v697
          %1319 = vmatpush.msra.mxu0 %v696
          %1320 = vmatpush.msra.mxu0 %v695
          %1321 = vmatpush.msra.mxu0 %v694
          %1322 = vmatpush.msra.mxu0 %v693
          %1323 = vmatpush.msra.mxu0 %v692
          %1324 = vmatpush.msra.mxu0 %v691
          %1325 = vmatpush.msra.mxu0 %v690
          %1326 = vmatpush.msra.mxu0 %v689
          %1327 = vmatpush.msra.mxu0 %v688
          %1328 = vmatpush.msra.mxu0 %v687
          %1329 = vmatpush.msra.mxu0 %v686
          %1330 = vmatmul.f32.gmra.mxu0 %v1293
          %v1331 = vpop.f32.mrf.mxu0
          %v1332 = vadd.f32 %v1312, %v1331
          %1333 = vdwg.mxu0
          %v1334 = vrcp.pop 6.0
          %v1335 = vmul.f32 6.0, %v1334
          %v1336 = vsub.f32 1.0, %v1335
          %v1337 = vmul.f32 %v1334, %v1336
          %v1338 = vadd.f32 %v1334, %v1337
          %vm1339 = vweird.f32 %v1334
          %v1340 = vsel %vm1339, %v1334, %v1338
          %s1341 = vtos %v1340
          %s1342 = smul.f32 %s426, %s1341
          %v1343 = vadd.f32 %v941, %v1136
          %v1344 = vmul.f32 %v1343, 2.0
          %v1345 = vadd.f32 %v744, %v1344
          %v1346 = vadd.f32 %v1345, %v1332
          %v1347 = vstv %s1342
          %v1348 = vmul.f32 %v1347, %v1346
          %v1349 = vadd.f32 %v427, %v1348
          %1350 = vst [vmem:[#allocation2] sm:$0xff] %v1349
          %1351 = vst [vmem:[%s412] sm:$0xff] %v1349
        $region88: #{tpu_custom_call.1} parent=55 // pred_fallthru
          _
        %s1352 = sand.u32 %s237, 1
        %s1353 = scalar_lea.sflag [#allocation5], %s1352
        %s1354 = sand.u32 %s237, 1
        %s1355 = smul.addr %s1354, 8
        %s1356 = scalar_lea.vmem [#allocation15], %s1355
        // Predicated region
        $region89: #{tpu_custom_call.1} parent=55 // pred_check
          %p1357 = pneg %p247
        $region90: #{tpu_custom_call.1} parent=55 // pred_check_branch
          %1359 = sbr.rel (%p1357) target = $region92
        $region91: #{tpu_custom_call.1} parent=55 // pred_region
          %1361 = vsyncadd %s1353, 0
          %s1362 = smul.addr %s32, 8
          %s1363 = scalar_lea.hbm %s9, %s1362
          %s1365 = sshll.u32 %s1356, 4
          %s1366 = int_to_ptr.vmem [resolvable:$true] %s1365
          %s1367 = sshll.u32 %s1363, 4
          %s1368 = int_to_ptr.hbm [resolvable:$true] %s1367
          %1370 = dma.vmem_to_hbm [thread:$0]  %s1366, 128, %s1368, %s1353
        $region92: #{tpu_custom_call.1} parent=55 // pred_fallthru
          _
      $region56: #{tpu_custom_call.1} parent=5 // pred_fallthru
        _
      %p1371 = scmp.le.s32.totalorder 2, %s23
      // Predicated region
      $region93: #{tpu_custom_call.1} parent=5 // pred_check
        %p1372 = pneg %p1371
      $region94: #{tpu_custom_call.1} parent=5 // pred_check_branch
        %1374 = sbr.rel (%p1372) target = $region96
      $region95: #{tpu_custom_call.1} parent=5 // pred_region
        %s1375 = ssub.s32 %s23, 2
        // Predicated region
        $region97: #{tpu_custom_call.1} parent=95 // pred_check
          %p1376 = pneg %p253
        $region98: #{tpu_custom_call.1} parent=95 // pred_check_branch
          %1378 = sbr.rel (%p1376) target = $region100
        $region99: #{tpu_custom_call.1} parent=95 // pred_region
          %s1379 = sand.u32 %s238, 1
          %s1380 = scalar_lea.sflag [#allocation5], %s1379
          %s1381 = sand.u32 %s238, 1
          %s1382 = smul.addr %s1381, 8
          %s1383 = scalar_lea.vmem [#allocation15], %s1382
          %1385 = dma.done %s1380, 128
        $region100: #{tpu_custom_call.1} parent=95 // pred_fallthru
          _
      $region96: #{tpu_custom_call.1} parent=5 // pred_fallthru
        _
    $region6: #{tpu_custom_call.1} parent=1 // loop_footer
      %s27 = sadd.s32 1, %s23
    $region7: #{tpu_custom_call.1} parent=1 // loop_footer_branch
      %22 = sbr.rel target = $region3
    $region8: #{tpu_custom_call.1} parent=1 // loop_exit
      _
    %1386 = vsyncpa [#allocation4], 1
    %s1387 = scalar_lea.sflag [#allocation4], 1
    %1388 = vsyncpa %s1387, 1
    %1389 = vsyncpa [#allocation11], 1
    %1390 = vsyncpa [#allocation14], 1
    %1391 = vsyncpa [#allocation5], 1
    %s1392 = scalar_lea.sflag [#allocation5], 1
    %1393 = vsyncpa %s1392, 1
    %1394 = vsyncpa [#allocation6], 1
    %s1395 = scalar_lea.sflag [#allocation6], 1
    %1396 = vsyncpa %s1395, 1
    %1397 = vsyncpa [#allocation8], 1

</llo_original>
